<compile_context>
chip_gen: v6e
topology: v6e:2x2x1
jax: 0.10.0
libtpu: 0.0.40
codegen_flags: <defaults>
</compile_context>

<pallas_src>
import functools

import jax
import jax.numpy as jnp
from jax import lax
from jax.experimental import pallas as pl
from jax.experimental.pallas import tpu as pltpu

# ---------------- synthetic vocoder configuration ----------------
NUM_MELS = 16
HIDDEN = 32                      # upsample_initial_channel
UPSAMPLE_RATES = (2, 2)          # hop_length = 4
UPSAMPLE_KERNELS = (4, 4)        # 2 * rate
RES_KERNEL = 3
RES_DILATIONS = (1, 3)
PRE_POST_KERNEL = 7
LRELU_SLOPE = 0.1
HOP = 1
for _r in UPSAMPLE_RATES:
    HOP *= _r

# The polyphase upsampler below is specialised to stride=2, K=4, padding=1.
assert all(r == 2 and k == 4 for r, k in zip(UPSAMPLE_RATES, UPSAMPLE_KERNELS))


# ---------------- fused Pallas kernel ----------------
def _fused_vocoder_kernel(mel_ref, *refs):
    """mel_ref: (1, NUM_MELS, T). refs = packed weights/biases (pack_params
    order) followed by the output ref (1, 1, T*HOP)."""
    o_ref = refs[-1]
    it = iter(refs[:-1])
    nxt = lambda: next(it)[...]

    def leaky(v):
        return jnp.where(v > 0, v, LRELU_SLOPE * v)

    def conv1d(x, w2, b, K, dilation):
        # "same" Conv1d: in-kernel pad via concat, im2col -> one MXU matmul.
        c_in, t = x.shape
        pad = dilation * (K - 1) // 2
        if pad:
            z = jnp.zeros((c_in, pad), jnp.float32)
            x = jnp.concatenate([z, x, z], axis=1)
        cols = jnp.concatenate(
            [x[:, k * dilation:k * dilation + t] for k in range(K)], axis=0
        ).astype(jnp.bfloat16)                                   # (K*C_in, t)
        return jnp.dot(w2, cols, preferred_element_type=jnp.float32) + b

    def up2x(x, w_e, w_o, b):
        # Polyphase ConvTranspose1d(c_in, c_out, K=4, stride=2, padding=1):
        #   even[m] = W1^T x[m]   + W3^T x[m-1]
        #   odd[m]  = W0^T x[m+1] + W2^T x[m]
        c_in, tm = x.shape
        z = jnp.zeros((c_in, 1), jnp.float32)
        x_prev = jnp.concatenate([z, x[:, :tm - 1]], axis=1)
        x_next = jnp.concatenate([x[:, 1:], z], axis=1)
        cols_e = jnp.concatenate([x, x_prev], axis=0).astype(jnp.bfloat16)
        cols_o = jnp.concatenate([x_next, x], axis=0).astype(jnp.bfloat16)
        even = jnp.dot(w_e, cols_e, preferred_element_type=jnp.float32)
        odd = jnp.dot(w_o, cols_o, preferred_element_type=jnp.float32)
        # Interleave phases with 0/1 selection matmuls:
        #   y[:, 2m] = even[:, m], y[:, 2m+1] = odd[:, m]
        # (stays on the MXU; avoids reshape / scatter / strided stores).
        row = lax.broadcasted_iota(jnp.int32, (tm, 2 * tm), 0)
        col = lax.broadcasted_iota(jnp.int32, (tm, 2 * tm), 1)
        s_e = (col == 2 * row).astype(jnp.float32)
        s_o = (col == 2 * row + 1).astype(jnp.float32)
        y = (jnp.dot(even, s_e, preferred_element_type=jnp.float32)
             + jnp.dot(odd, s_o, preferred_element_type=jnp.float32))
        return y + b

    x = conv1d(mel_ref[0], nxt(), nxt(), PRE_POST_KERNEL, 1)       # conv_pre
    for _stage in range(len(UPSAMPLE_RATES)):
        x = up2x(leaky(x), nxt(), nxt(), nxt())                    # upsample
        for d in RES_DILATIONS:                                    # residual convs (fused add)
            x = x + conv1d(leaky(x), nxt(), nxt(), RES_KERNEL, d)
    o_ref[0] = jnp.tanh(conv1d(leaky(x), nxt(), nxt(), PRE_POST_KERNEL, 1))


# ---------------- parameter init (deterministic, synthetic) ----------------
def init_params(key):
    params = {}

    def nrm(k, shape, scale=0.1):
        return scale * jax.random.normal(k, shape, jnp.float32)

    keys = iter(jax.random.split(key, 64))
    params["conv_pre_w"] = nrm(next(keys), (HIDDEN, NUM_MELS, PRE_POST_KERNEL))
    params["conv_pre_b"] = nrm(next(keys), (HIDDEN,))

    c = HIDDEN
    for i, (r, k) in enumerate(zip(UPSAMPLE_RATES, UPSAMPLE_KERNELS)):
        c_out = c // 2
        params[f"up{i}_w"] = nrm(next(keys), (c, c_out, k))        # ConvTranspose1d layout
        params[f"up{i}_b"] = nrm(next(keys), (c_out,))
        for d in RES_DILATIONS:
            params[f"res{i}_{d}_w"] = nrm(next(keys), (c_out, c_out, RES_KERNEL))
            params[f"res{i}_{d}_b"] = nrm(next(keys), (c_out,))
        c = c_out

    params["conv_post_w"] = nrm(next(keys), (1, c, PRE_POST_KERNEL))
    params["conv_post_b"] = nrm(next(keys), (1,))
    return params


def pack_params(params):
    """Host-side, one-time repack into MXU-friendly matmul layouts."""
    def conv_w(w):   # (C_out, C_in, K) -> (C_out, K*C_in), bf16
        c_out, c_in, k = w.shape
        return jnp.transpose(w, (0, 2, 1)).reshape(c_out, k * c_in).astype(jnp.bfloat16)

    def bias(b):     # (C_out,) -> (C_out, 1), f32
        return b.reshape(-1, 1).astype(jnp.float32)

    def upconv_w(w_t):   # (C_in, C_out, 4) -> even/odd polyphase (C_out, 2*C_in), bf16
        w_e = jnp.concatenate([w_t[:, :, 1].T, w_t[:, :, 3].T], axis=1)
        w_o = jnp.concatenate([w_t[:, :, 0].T, w_t[:, :, 2].T], axis=1)
        return w_e.astype(jnp.bfloat16), w_o.astype(jnp.bfloat16)

    packed = [conv_w(params["conv_pre_w"]), bias(params["conv_pre_b"])]
    for i in range(len(UPSAMPLE_RATES)):
        w_e, w_o = upconv_w(params[f"up{i}_w"])
        packed += [w_e, w_o, bias(params[f"up{i}_b"])]
        for d in RES_DILATIONS:
            packed += [conv_w(params[f"res{i}_{d}_w"]), bias(params[f"res{i}_{d}_b"])]
    packed += [conv_w(params["conv_post_w"]), bias(params["conv_post_b"])]
    return packed


# ---------------- cost estimate (scheduler hint) ----------------
def _cost_estimate(B, T, packed):
    flops = 0
    t, c = T, HIDDEN
    flops += 2 * HIDDEN * PRE_POST_KERNEL * NUM_MELS * t            # conv_pre
    for r in UPSAMPLE_RATES:
        c_out = c // 2
        flops += 2 * (2 * c_out * (2 * c) * t)                      # polyphase matmuls
        flops += 2 * (2 * c_out * t * (t * r))                      # interleave matmuls
        t *= r
        flops += len(RES_DILATIONS) * 2 * c_out * RES_KERNEL * c_out * t
        c = c_out
    flops += 2 * 1 * PRE_POST_KERNEL * c * t                        # conv_post
    flops *= B
    bytes_accessed = (B * NUM_MELS * T * 4 + B * t * 4
                      + sum(int(p.size) * p.dtype.itemsize for p in packed))
    return pl.CostEstimate(flops=int(flops), transcendentals=int(B * t),
                           bytes_accessed=int(bytes_accessed))


# ---------------- wrapper ----------------
def vocoder_forward(packed_params, mel):
    """mel: (B, NUM_MELS, T) f32 -> audio (B, 1, T*HOP) f32 — one pallas_call."""
    B, c_mel, T = mel.shape
    t_audio = T * HOP
    in_specs = [pl.BlockSpec((1, c_mel, T), lambda b: (b, 0, 0))]
    in_specs += [pl.BlockSpec(p.shape, lambda b: (0, 0)) for p in packed_params]
    return pl.pallas_call(
        _fused_vocoder_kernel,
        out_shape=jax.ShapeDtypeStruct((B, 1, t_audio), jnp.float32),
        grid=(B,),
        in_specs=in_specs,
        out_specs=pl.BlockSpec((1, 1, t_audio), lambda b: (b, 0, 0)),
        compiler_params=pltpu.CompilerParams(
            dimension_semantics=("parallel",),
            vmem_limit_bytes=32 * 1024 * 1024,
        ),
        cost_estimate=_cost_estimate(B, T, packed_params),
    )(mel, *packed_params)


def inference_vocoder(packed_params, x):
    """InferenceVocoder.forward: x (B, T, NUM_MELS) -> vocoder(x.transpose(1, 2))."""
    return vocoder_forward(packed_params, jnp.transpose(x, (0, 2, 1)))


# ---------------- driver ----------------
if __name__ == "__main__":
    key = jax.random.PRNGKey(0)
    pkey, xkey = jax.random.split(key)
    B, T = 2, 32                     # T*HOP = 128 -> lane-dense output store
    params = init_params(pkey)
    packed = pack_params(params)
    x = jax.random.normal(xkey, (B, T, NUM_MELS), jnp.float32)

    fwd = jax.jit(functools.partial(inference_vocoder, packed))
    y = fwd(x)
    jax.block_until_ready(y)

    assert y.shape == (B, 1, T * HOP), y.shape
    assert bool(jnp.all(jnp.isfinite(y)))
    assert bool(jnp.all(jnp.abs(y) <= 1.0))   # tanh output range
    print("KERNEL_OK")
</pallas_src>

<mosaic_0001>
module attributes {stable_mosaic.version = 11 : i64} {
  func.func @_fused_vocoder_kernel(%arg0: i32, %arg1: memref<1x16x32xf32, #tpu.memory_space<vmem>>, %arg2: memref<32x112xbf16, #tpu.memory_space<vmem>>, %arg3: memref<32x1xf32, #tpu.memory_space<vmem>>, %arg4: memref<16x64xbf16, #tpu.memory_space<vmem>>, %arg5: memref<16x64xbf16, #tpu.memory_space<vmem>>, %arg6: memref<16x1xf32, #tpu.memory_space<vmem>>, %arg7: memref<16x48xbf16, #tpu.memory_space<vmem>>, %arg8: memref<16x1xf32, #tpu.memory_space<vmem>>, %arg9: memref<16x48xbf16, #tpu.memory_space<vmem>>, %arg10: memref<16x1xf32, #tpu.memory_space<vmem>>, %arg11: memref<8x32xbf16, #tpu.memory_space<vmem>>, %arg12: memref<8x32xbf16, #tpu.memory_space<vmem>>, %arg13: memref<8x1xf32, #tpu.memory_space<vmem>>, %arg14: memref<8x24xbf16, #tpu.memory_space<vmem>>, %arg15: memref<8x1xf32, #tpu.memory_space<vmem>>, %arg16: memref<8x24xbf16, #tpu.memory_space<vmem>>, %arg17: memref<8x1xf32, #tpu.memory_space<vmem>>, %arg18: memref<1x56xbf16, #tpu.memory_space<vmem>>, %arg19: memref<1x1xf32, #tpu.memory_space<vmem>>, %arg20: memref<1x1x128xf32, #tpu.memory_space<vmem>>) attributes {dimension_semantics = [#tpu.dimension_semantics<parallel>], iteration_bounds = array<i64: 2>, scalar_prefetch = 0 : i64, scratch_operands = 0 : i64, tpu.core_type = #tpu.core_type<tc>, window_params = [{transform_indices = @transform_0, window_bounds = array<i64: 1, 16, 32>}, {pipeline_mode = #tpu.pipeline_mode<synchronous>, transform_indices = @transform_1, window_bounds = array<i64: 32, 112>}, {pipeline_mode = #tpu.pipeline_mode<synchronous>, transform_indices = @transform_2, window_bounds = array<i64: 32, 1>}, {pipeline_mode = #tpu.pipeline_mode<synchronous>, transform_indices = @transform_3, window_bounds = array<i64: 16, 64>}, {pipeline_mode = #tpu.pipeline_mode<synchronous>, transform_indices = @transform_4, window_bounds = array<i64: 16, 64>}, {pipeline_mode = #tpu.pipeline_mode<synchronous>, transform_indices = @transform_5, window_bounds = array<i64: 16, 1>}, {pipeline_mode = #tpu.pipeline_mode<synchronous>, transform_indices = @transform_6, window_bounds = array<i64: 16, 48>}, {pipeline_mode = #tpu.pipeline_mode<synchronous>, transform_indices = @transform_7, window_bounds = array<i64: 16, 1>}, {pipeline_mode = #tpu.pipeline_mode<synchronous>, transform_indices = @transform_8, window_bounds = array<i64: 16, 48>}, {pipeline_mode = #tpu.pipeline_mode<synchronous>, transform_indices = @transform_9, window_bounds = array<i64: 16, 1>}, {pipeline_mode = #tpu.pipeline_mode<synchronous>, transform_indices = @transform_10, window_bounds = array<i64: 8, 32>}, {pipeline_mode = #tpu.pipeline_mode<synchronous>, transform_indices = @transform_11, window_bounds = array<i64: 8, 32>}, {pipeline_mode = #tpu.pipeline_mode<synchronous>, transform_indices = @transform_12, window_bounds = array<i64: 8, 1>}, {pipeline_mode = #tpu.pipeline_mode<synchronous>, transform_indices = @transform_13, window_bounds = array<i64: 8, 24>}, {pipeline_mode = #tpu.pipeline_mode<synchronous>, transform_indices = @transform_14, window_bounds = array<i64: 8, 1>}, {pipeline_mode = #tpu.pipeline_mode<synchronous>, transform_indices = @transform_15, window_bounds = array<i64: 8, 24>}, {pipeline_mode = #tpu.pipeline_mode<synchronous>, transform_indices = @transform_16, window_bounds = array<i64: 8, 1>}, {pipeline_mode = #tpu.pipeline_mode<synchronous>, transform_indices = @transform_17, window_bounds = array<i64: 1, 56>}, {pipeline_mode = #tpu.pipeline_mode<synchronous>, transform_indices = @transform_18, window_bounds = array<i64: 1, 1>}, {transform_indices = @transform_19, window_bounds = array<i64: 1, 1, 128>}]} {
    %c0 = arith.constant 0 : index
    %c0_0 = arith.constant 0 : index
    %c0_1 = arith.constant 0 : index
    %0 = vector.load %arg1[%c0, %c0_0, %c0_1] : memref<1x16x32xf32, #tpu.memory_space<vmem>>, vector<1x16x32xf32>
    %1 = vector.shape_cast %0 : vector<1x16x32xf32> to vector<16x32xf32>
    %c0_2 = arith.constant 0 : index
    %c0_3 = arith.constant 0 : index
    %2 = vector.load %arg2[%c0_2, %c0_3] : memref<32x112xbf16, #tpu.memory_space<vmem>>, vector<32x112xbf16>
    %c0_4 = arith.constant 0 : index
    %c0_5 = arith.constant 0 : index
    %3 = vector.load %arg3[%c0_4, %c0_5] : memref<32x1xf32, #tpu.memory_space<vmem>>, vector<32x1xf32>
    %cst = arith.constant 0.000000e+00 : f32
    %4 = vector.broadcast %cst : f32 to vector<16x3xf32>
    %5 = tpu.concatenate %4, %1, %4 in 1 : vector<16x3xf32>, vector<16x32xf32>, vector<16x3xf32> -> vector<16x38xf32>
    %6 = vector.extract_strided_slice %5 {offsets = [0, 0], sizes = [16, 32], strides = [1, 1]} : vector<16x38xf32> to vector<16x32xf32>
    %7 = vector.extract_strided_slice %5 {offsets = [0, 1], sizes = [16, 32], strides = [1, 1]} : vector<16x38xf32> to vector<16x32xf32>
    %8 = vector.extract_strided_slice %5 {offsets = [0, 2], sizes = [16, 32], strides = [1, 1]} : vector<16x38xf32> to vector<16x32xf32>
    %9 = vector.extract_strided_slice %5 {offsets = [0, 3], sizes = [16, 32], strides = [1, 1]} : vector<16x38xf32> to vector<16x32xf32>
    %10 = vector.extract_strided_slice %5 {offsets = [0, 4], sizes = [16, 32], strides = [1, 1]} : vector<16x38xf32> to vector<16x32xf32>
    %11 = vector.extract_strided_slice %5 {offsets = [0, 5], sizes = [16, 32], strides = [1, 1]} : vector<16x38xf32> to vector<16x32xf32>
    %12 = vector.extract_strided_slice %5 {offsets = [0, 6], sizes = [16, 32], strides = [1, 1]} : vector<16x38xf32> to vector<16x32xf32>
    %13 = tpu.concatenate %6, %7, %8, %9, %10, %11, %12 in 0 : vector<16x32xf32>, vector<16x32xf32>, vector<16x32xf32>, vector<16x32xf32>, vector<16x32xf32>, vector<16x32xf32>, vector<16x32xf32> -> vector<112x32xf32>
    %14 = arith.truncf %13 : vector<112x32xf32> to vector<112x32xbf16>
    %cst_6 = arith.constant dense<0.000000e+00> : vector<32x32xf32>
    %15 = tpu.matmul %2, %14, %cst_6 {dimension_numbers = #tpu.dot_dimension_numbers<[1], [0], [0], [1], [0, 0, 1, 1], [], []>} : vector<32x112xbf16>, vector<112x32xbf16>, vector<32x32xf32> -> vector<32x32xf32>
    %16 = vector.broadcast %3 : vector<32x1xf32> to vector<32x32xf32>
    %17 = arith.addf %15, %16 : vector<32x32xf32>
    %cst_7 = arith.constant 0.000000e+00 : f32
    %18 = vector.broadcast %cst_7 : f32 to vector<32x32xf32>
    %19 = arith.cmpf ogt, %17, %18 : vector<32x32xf32>
    %cst_8 = arith.constant 1.000000e-01 : f32
    %20 = vector.broadcast %cst_8 : f32 to vector<32x32xf32>
    %21 = arith.mulf %20, %17 : vector<32x32xf32>
    %22 = arith.select %19, %17, %21 : vector<32x32xi1>, vector<32x32xf32>
    %c0_9 = arith.constant 0 : index
    %c0_10 = arith.constant 0 : index
    %23 = vector.load %arg4[%c0_9, %c0_10] : memref<16x64xbf16, #tpu.memory_space<vmem>>, vector<16x64xbf16>
    %c0_11 = arith.constant 0 : index
    %c0_12 = arith.constant 0 : index
    %24 = vector.load %arg5[%c0_11, %c0_12] : memref<16x64xbf16, #tpu.memory_space<vmem>>, vector<16x64xbf16>
    %c0_13 = arith.constant 0 : index
    %c0_14 = arith.constant 0 : index
    %25 = vector.load %arg6[%c0_13, %c0_14] : memref<16x1xf32, #tpu.memory_space<vmem>>, vector<16x1xf32>
    %cst_15 = arith.constant 0.000000e+00 : f32
    %26 = vector.broadcast %cst_15 : f32 to vector<32x1xf32>
    %27 = vector.extract_strided_slice %22 {offsets = [0, 0], sizes = [32, 31], strides = [1, 1]} : vector<32x32xf32> to vector<32x31xf32>
    %28 = tpu.concatenate %26, %27 in 1 : vector<32x1xf32>, vector<32x31xf32> -> vector<32x32xf32>
    %29 = vector.extract_strided_slice %22 {offsets = [0, 1], sizes = [32, 31], strides = [1, 1]} : vector<32x32xf32> to vector<32x31xf32>
    %30 = tpu.concatenate %29, %26 in 1 : vector<32x31xf32>, vector<32x1xf32> -> vector<32x32xf32>
    %31 = tpu.concatenate %22, %28 in 0 : vector<32x32xf32>, vector<32x32xf32> -> vector<64x32xf32>
    %32 = arith.truncf %31 : vector<64x32xf32> to vector<64x32xbf16>
    %33 = tpu.concatenate %30, %22 in 0 : vector<32x32xf32>, vector<32x32xf32> -> vector<64x32xf32>
    %34 = arith.truncf %33 : vector<64x32xf32> to vector<64x32xbf16>
    %cst_16 = arith.constant dense<0.000000e+00> : vector<16x32xf32>
    %35 = tpu.matmul %23, %32, %cst_16 {dimension_numbers = #tpu.dot_dimension_numbers<[1], [0], [0], [1], [0, 0, 1, 1], [], []>} : vector<16x64xbf16>, vector<64x32xbf16>, vector<16x32xf32> -> vector<16x32xf32>
    %cst_17 = arith.constant dense<0.000000e+00> : vector<16x32xf32>
    %36 = tpu.matmul %24, %34, %cst_17 {dimension_numbers = #tpu.dot_dimension_numbers<[1], [0], [0], [1], [0, 0, 1, 1], [], []>} : vector<16x64xbf16>, vector<64x32xbf16>, vector<16x32xf32> -> vector<16x32xf32>
    %37 = tpu.iota {dimensions = array<i32: 0>} : vector<32x64xi32>
    %38 = tpu.iota {dimensions = array<i32: 1>} : vector<32x64xi32>
    %c2_i32 = arith.constant 2 : i32
    %39 = vector.broadcast %c2_i32 : i32 to vector<32x64xi32>
    %40 = arith.muli %39, %37 : vector<32x64xi32>
    %41 = arith.cmpi eq, %38, %40 : vector<32x64xi32>
    %42 = arith.extui %41 : vector<32x64xi1> to vector<32x64xi32>
    %43 = arith.sitofp %42 : vector<32x64xi32> to vector<32x64xf32>
    %c2_i32_18 = arith.constant 2 : i32
    %44 = vector.broadcast %c2_i32_18 : i32 to vector<32x64xi32>
    %45 = arith.muli %44, %37 : vector<32x64xi32>
    %c1_i32 = arith.constant 1 : i32
    %46 = vector.broadcast %c1_i32 : i32 to vector<32x64xi32>
    %47 = arith.addi %45, %46 : vector<32x64xi32>
    %48 = arith.cmpi eq, %38, %47 : vector<32x64xi32>
    %49 = arith.extui %48 : vector<32x64xi1> to vector<32x64xi32>
    %50 = arith.sitofp %49 : vector<32x64xi32> to vector<32x64xf32>
    %cst_19 = arith.constant dense<0.000000e+00> : vector<16x64xf32>
    %51 = tpu.matmul %35, %43, %cst_19 {dimension_numbers = #tpu.dot_dimension_numbers<[1], [0], [0], [1], [0, 0, 1, 1], [], []>} : vector<16x32xf32>, vector<32x64xf32>, vector<16x64xf32> -> vector<16x64xf32>
    %cst_20 = arith.constant dense<0.000000e+00> : vector<16x64xf32>
    %52 = tpu.matmul %36, %50, %cst_20 {dimension_numbers = #tpu.dot_dimension_numbers<[1], [0], [0], [1], [0, 0, 1, 1], [], []>} : vector<16x32xf32>, vector<32x64xf32>, vector<16x64xf32> -> vector<16x64xf32>
    %53 = arith.addf %51, %52 : vector<16x64xf32>
    %54 = vector.broadcast %25 : vector<16x1xf32> to vector<16x64xf32>
    %55 = arith.addf %53, %54 : vector<16x64xf32>
    %cst_21 = arith.constant 0.000000e+00 : f32
    %56 = vector.broadcast %cst_21 : f32 to vector<16x64xf32>
    %57 = arith.cmpf ogt, %55, %56 : vector<16x64xf32>
    %cst_22 = arith.constant 1.000000e-01 : f32
    %58 = vector.broadcast %cst_22 : f32 to vector<16x64xf32>
    %59 = arith.mulf %58, %55 : vector<16x64xf32>
    %60 = arith.select %57, %55, %59 : vector<16x64xi1>, vector<16x64xf32>
    %c0_23 = arith.constant 0 : index
    %c0_24 = arith.constant 0 : index
    %61 = vector.load %arg7[%c0_23, %c0_24] : memref<16x48xbf16, #tpu.memory_space<vmem>>, vector<16x48xbf16>
    %c0_25 = arith.constant 0 : index
    %c0_26 = arith.constant 0 : index
    %62 = vector.load %arg8[%c0_25, %c0_26] : memref<16x1xf32, #tpu.memory_space<vmem>>, vector<16x1xf32>
    %cst_27 = arith.constant 0.000000e+00 : f32
    %63 = vector.broadcast %cst_27 : f32 to vector<16x1xf32>
    %64 = tpu.concatenate %63, %60, %63 in 1 : vector<16x1xf32>, vector<16x64xf32>, vector<16x1xf32> -> vector<16x66xf32>
    %65 = vector.extract_strided_slice %64 {offsets = [0, 0], sizes = [16, 64], strides = [1, 1]} : vector<16x66xf32> to vector<16x64xf32>
    %66 = vector.extract_strided_slice %64 {offsets = [0, 1], sizes = [16, 64], strides = [1, 1]} : vector<16x66xf32> to vector<16x64xf32>
    %67 = vector.extract_strided_slice %64 {offsets = [0, 2], sizes = [16, 64], strides = [1, 1]} : vector<16x66xf32> to vector<16x64xf32>
    %68 = tpu.concatenate %65, %66, %67 in 0 : vector<16x64xf32>, vector<16x64xf32>, vector<16x64xf32> -> vector<48x64xf32>
    %69 = arith.truncf %68 : vector<48x64xf32> to vector<48x64xbf16>
    %cst_28 = arith.constant dense<0.000000e+00> : vector<16x64xf32>
    %70 = tpu.matmul %61, %69, %cst_28 {dimension_numbers = #tpu.dot_dimension_numbers<[1], [0], [0], [1], [0, 0, 1, 1], [], []>} : vector<16x48xbf16>, vector<48x64xbf16>, vector<16x64xf32> -> vector<16x64xf32>
    %71 = vector.broadcast %62 : vector<16x1xf32> to vector<16x64xf32>
    %72 = arith.addf %70, %71 : vector<16x64xf32>
    %73 = arith.addf %55, %72 : vector<16x64xf32>
    %cst_29 = arith.constant 0.000000e+00 : f32
    %74 = vector.broadcast %cst_29 : f32 to vector<16x64xf32>
    %75 = arith.cmpf ogt, %73, %74 : vector<16x64xf32>
    %cst_30 = arith.constant 1.000000e-01 : f32
    %76 = vector.broadcast %cst_30 : f32 to vector<16x64xf32>
    %77 = arith.mulf %76, %73 : vector<16x64xf32>
    %78 = arith.select %75, %73, %77 : vector<16x64xi1>, vector<16x64xf32>
    %c0_31 = arith.constant 0 : index
    %c0_32 = arith.constant 0 : index
    %79 = vector.load %arg9[%c0_31, %c0_32] : memref<16x48xbf16, #tpu.memory_space<vmem>>, vector<16x48xbf16>
    %c0_33 = arith.constant 0 : index
    %c0_34 = arith.constant 0 : index
    %80 = vector.load %arg10[%c0_33, %c0_34] : memref<16x1xf32, #tpu.memory_space<vmem>>, vector<16x1xf32>
    %cst_35 = arith.constant 0.000000e+00 : f32
    %81 = vector.broadcast %cst_35 : f32 to vector<16x3xf32>
    %82 = tpu.concatenate %81, %78, %81 in 1 : vector<16x3xf32>, vector<16x64xf32>, vector<16x3xf32> -> vector<16x70xf32>
    %83 = vector.extract_strided_slice %82 {offsets = [0, 0], sizes = [16, 64], strides = [1, 1]} : vector<16x70xf32> to vector<16x64xf32>
    %84 = vector.extract_strided_slice %82 {offsets = [0, 3], sizes = [16, 64], strides = [1, 1]} : vector<16x70xf32> to vector<16x64xf32>
    %85 = vector.extract_strided_slice %82 {offsets = [0, 6], sizes = [16, 64], strides = [1, 1]} : vector<16x70xf32> to vector<16x64xf32>
    %86 = tpu.concatenate %83, %84, %85 in 0 : vector<16x64xf32>, vector<16x64xf32>, vector<16x64xf32> -> vector<48x64xf32>
    %87 = arith.truncf %86 : vector<48x64xf32> to vector<48x64xbf16>
    %cst_36 = arith.constant dense<0.000000e+00> : vector<16x64xf32>
    %88 = tpu.matmul %79, %87, %cst_36 {dimension_numbers = #tpu.dot_dimension_numbers<[1], [0], [0], [1], [0, 0, 1, 1], [], []>} : vector<16x48xbf16>, vector<48x64xbf16>, vector<16x64xf32> -> vector<16x64xf32>
    %89 = vector.broadcast %80 : vector<16x1xf32> to vector<16x64xf32>
    %90 = arith.addf %88, %89 : vector<16x64xf32>
    %91 = arith.addf %73, %90 : vector<16x64xf32>
    %cst_37 = arith.constant 0.000000e+00 : f32
    %92 = vector.broadcast %cst_37 : f32 to vector<16x64xf32>
    %93 = arith.cmpf ogt, %91, %92 : vector<16x64xf32>
    %cst_38 = arith.constant 1.000000e-01 : f32
    %94 = vector.broadcast %cst_38 : f32 to vector<16x64xf32>
    %95 = arith.mulf %94, %91 : vector<16x64xf32>
    %96 = arith.select %93, %91, %95 : vector<16x64xi1>, vector<16x64xf32>
    %c0_39 = arith.constant 0 : index
    %c0_40 = arith.constant 0 : index
    %97 = vector.load %arg11[%c0_39, %c0_40] : memref<8x32xbf16, #tpu.memory_space<vmem>>, vector<8x32xbf16>
    %c0_41 = arith.constant 0 : index
    %c0_42 = arith.constant 0 : index
    %98 = vector.load %arg12[%c0_41, %c0_42] : memref<8x32xbf16, #tpu.memory_space<vmem>>, vector<8x32xbf16>
    %c0_43 = arith.constant 0 : index
    %c0_44 = arith.constant 0 : index
    %99 = vector.load %arg13[%c0_43, %c0_44] : memref<8x1xf32, #tpu.memory_space<vmem>>, vector<8x1xf32>
    %cst_45 = arith.constant 0.000000e+00 : f32
    %100 = vector.broadcast %cst_45 : f32 to vector<16x1xf32>
    %101 = vector.extract_strided_slice %96 {offsets = [0, 0], sizes = [16, 63], strides = [1, 1]} : vector<16x64xf32> to vector<16x63xf32>
    %102 = tpu.concatenate %100, %101 in 1 : vector<16x1xf32>, vector<16x63xf32> -> vector<16x64xf32>
    %103 = vector.extract_strided_slice %96 {offsets = [0, 1], sizes = [16, 63], strides = [1, 1]} : vector<16x64xf32> to vector<16x63xf32>
    %104 = tpu.concatenate %103, %100 in 1 : vector<16x63xf32>, vector<16x1xf32> -> vector<16x64xf32>
    %105 = tpu.concatenate %96, %102 in 0 : vector<16x64xf32>, vector<16x64xf32> -> vector<32x64xf32>
    %106 = arith.truncf %105 : vector<32x64xf32> to vector<32x64xbf16>
    %107 = tpu.concatenate %104, %96 in 0 : vector<16x64xf32>, vector<16x64xf32> -> vector<32x64xf32>
    %108 = arith.truncf %107 : vector<32x64xf32> to vector<32x64xbf16>
    %cst_46 = arith.constant dense<0.000000e+00> : vector<8x64xf32>
    %109 = tpu.matmul %97, %106, %cst_46 {dimension_numbers = #tpu.dot_dimension_numbers<[1], [0], [0], [1], [0, 0, 1, 1], [], []>} : vector<8x32xbf16>, vector<32x64xbf16>, vector<8x64xf32> -> vector<8x64xf32>
    %cst_47 = arith.constant dense<0.000000e+00> : vector<8x64xf32>
    %110 = tpu.matmul %98, %108, %cst_47 {dimension_numbers = #tpu.dot_dimension_numbers<[1], [0], [0], [1], [0, 0, 1, 1], [], []>} : vector<8x32xbf16>, vector<32x64xbf16>, vector<8x64xf32> -> vector<8x64xf32>
    %111 = tpu.iota {dimensions = array<i32: 0>} : vector<64x128xi32>
    %112 = tpu.iota {dimensions = array<i32: 1>} : vector<64x128xi32>
    %c2_i32_48 = arith.constant 2 : i32
    %113 = vector.broadcast %c2_i32_48 : i32 to vector<64x128xi32>
    %114 = arith.muli %113, %111 : vector<64x128xi32>
    %115 = arith.cmpi eq, %112, %114 : vector<64x128xi32>
    %116 = arith.extui %115 : vector<64x128xi1> to vector<64x128xi32>
    %117 = arith.sitofp %116 : vector<64x128xi32> to vector<64x128xf32>
    %c2_i32_49 = arith.constant 2 : i32
    %118 = vector.broadcast %c2_i32_49 : i32 to vector<64x128xi32>
    %119 = arith.muli %118, %111 : vector<64x128xi32>
    %c1_i32_50 = arith.constant 1 : i32
    %120 = vector.broadcast %c1_i32_50 : i32 to vector<64x128xi32>
    %121 = arith.addi %119, %120 : vector<64x128xi32>
    %122 = arith.cmpi eq, %112, %121 : vector<64x128xi32>
    %123 = arith.extui %122 : vector<64x128xi1> to vector<64x128xi32>
    %124 = arith.sitofp %123 : vector<64x128xi32> to vector<64x128xf32>
    %cst_51 = arith.constant dense<0.000000e+00> : vector<8x128xf32>
    %125 = tpu.matmul %109, %117, %cst_51 {dimension_numbers = #tpu.dot_dimension_numbers<[1], [0], [0], [1], [0, 0, 1, 1], [], []>} : vector<8x64xf32>, vector<64x128xf32>, vector<8x128xf32> -> vector<8x128xf32>
    %cst_52 = arith.constant dense<0.000000e+00> : vector<8x128xf32>
    %126 = tpu.matmul %110, %124, %cst_52 {dimension_numbers = #tpu.dot_dimension_numbers<[1], [0], [0], [1], [0, 0, 1, 1], [], []>} : vector<8x64xf32>, vector<64x128xf32>, vector<8x128xf32> -> vector<8x128xf32>
    %127 = arith.addf %125, %126 : vector<8x128xf32>
    %128 = vector.broadcast %99 : vector<8x1xf32> to vector<8x128xf32>
    %129 = arith.addf %127, %128 : vector<8x128xf32>
    %cst_53 = arith.constant 0.000000e+00 : f32
    %130 = vector.broadcast %cst_53 : f32 to vector<8x128xf32>
    %131 = arith.cmpf ogt, %129, %130 : vector<8x128xf32>
    %cst_54 = arith.constant 1.000000e-01 : f32
    %132 = vector.broadcast %cst_54 : f32 to vector<8x128xf32>
    %133 = arith.mulf %132, %129 : vector<8x128xf32>
    %134 = arith.select %131, %129, %133 : vector<8x128xi1>, vector<8x128xf32>
    %c0_55 = arith.constant 0 : index
    %c0_56 = arith.constant 0 : index
    %135 = vector.load %arg14[%c0_55, %c0_56] : memref<8x24xbf16, #tpu.memory_space<vmem>>, vector<8x24xbf16>
    %c0_57 = arith.constant 0 : index
    %c0_58 = arith.constant 0 : index
    %136 = vector.load %arg15[%c0_57, %c0_58] : memref<8x1xf32, #tpu.memory_space<vmem>>, vector<8x1xf32>
    %cst_59 = arith.constant 0.000000e+00 : f32
    %137 = vector.broadcast %cst_59 : f32 to vector<8x1xf32>
    %138 = tpu.concatenate %137, %134, %137 in 1 : vector<8x1xf32>, vector<8x128xf32>, vector<8x1xf32> -> vector<8x130xf32>
    %139 = vector.extract_strided_slice %138 {offsets = [0, 0], sizes = [8, 128], strides = [1, 1]} : vector<8x130xf32> to vector<8x128xf32>
    %140 = vector.extract_strided_slice %138 {offsets = [0, 1], sizes = [8, 128], strides = [1, 1]} : vector<8x130xf32> to vector<8x128xf32>
    %141 = vector.extract_strided_slice %138 {offsets = [0, 2], sizes = [8, 128], strides = [1, 1]} : vector<8x130xf32> to vector<8x128xf32>
    %142 = tpu.concatenate %139, %140, %141 in 0 : vector<8x128xf32>, vector<8x128xf32>, vector<8x128xf32> -> vector<24x128xf32>
    %143 = arith.truncf %142 : vector<24x128xf32> to vector<24x128xbf16>
    %cst_60 = arith.constant dense<0.000000e+00> : vector<8x128xf32>
    %144 = tpu.matmul %135, %143, %cst_60 {dimension_numbers = #tpu.dot_dimension_numbers<[1], [0], [0], [1], [0, 0, 1, 1], [], []>} : vector<8x24xbf16>, vector<24x128xbf16>, vector<8x128xf32> -> vector<8x128xf32>
    %145 = vector.broadcast %136 : vector<8x1xf32> to vector<8x128xf32>
    %146 = arith.addf %144, %145 : vector<8x128xf32>
    %147 = arith.addf %129, %146 : vector<8x128xf32>
    %cst_61 = arith.constant 0.000000e+00 : f32
    %148 = vector.broadcast %cst_61 : f32 to vector<8x128xf32>
    %149 = arith.cmpf ogt, %147, %148 : vector<8x128xf32>
    %cst_62 = arith.constant 1.000000e-01 : f32
    %150 = vector.broadcast %cst_62 : f32 to vector<8x128xf32>
    %151 = arith.mulf %150, %147 : vector<8x128xf32>
    %152 = arith.select %149, %147, %151 : vector<8x128xi1>, vector<8x128xf32>
    %c0_63 = arith.constant 0 : index
    %c0_64 = arith.constant 0 : index
    %153 = vector.load %arg16[%c0_63, %c0_64] : memref<8x24xbf16, #tpu.memory_space<vmem>>, vector<8x24xbf16>
    %c0_65 = arith.constant 0 : index
    %c0_66 = arith.constant 0 : index
    %154 = vector.load %arg17[%c0_65, %c0_66] : memref<8x1xf32, #tpu.memory_space<vmem>>, vector<8x1xf32>
    %cst_67 = arith.constant 0.000000e+00 : f32
    %155 = vector.broadcast %cst_67 : f32 to vector<8x3xf32>
    %156 = tpu.concatenate %155, %152, %155 in 1 : vector<8x3xf32>, vector<8x128xf32>, vector<8x3xf32> -> vector<8x134xf32>
    %157 = vector.extract_strided_slice %156 {offsets = [0, 0], sizes = [8, 128], strides = [1, 1]} : vector<8x134xf32> to vector<8x128xf32>
    %158 = vector.extract_strided_slice %156 {offsets = [0, 3], sizes = [8, 128], strides = [1, 1]} : vector<8x134xf32> to vector<8x128xf32>
    %159 = vector.extract_strided_slice %156 {offsets = [0, 6], sizes = [8, 128], strides = [1, 1]} : vector<8x134xf32> to vector<8x128xf32>
    %160 = tpu.concatenate %157, %158, %159 in 0 : vector<8x128xf32>, vector<8x128xf32>, vector<8x128xf32> -> vector<24x128xf32>
    %161 = arith.truncf %160 : vector<24x128xf32> to vector<24x128xbf16>
    %cst_68 = arith.constant dense<0.000000e+00> : vector<8x128xf32>
    %162 = tpu.matmul %153, %161, %cst_68 {dimension_numbers = #tpu.dot_dimension_numbers<[1], [0], [0], [1], [0, 0, 1, 1], [], []>} : vector<8x24xbf16>, vector<24x128xbf16>, vector<8x128xf32> -> vector<8x128xf32>
    %163 = vector.broadcast %154 : vector<8x1xf32> to vector<8x128xf32>
    %164 = arith.addf %162, %163 : vector<8x128xf32>
    %165 = arith.addf %147, %164 : vector<8x128xf32>
    %cst_69 = arith.constant 0.000000e+00 : f32
    %166 = vector.broadcast %cst_69 : f32 to vector<8x128xf32>
    %167 = arith.cmpf ogt, %165, %166 : vector<8x128xf32>
    %cst_70 = arith.constant 1.000000e-01 : f32
    %168 = vector.broadcast %cst_70 : f32 to vector<8x128xf32>
    %169 = arith.mulf %168, %165 : vector<8x128xf32>
    %170 = arith.select %167, %165, %169 : vector<8x128xi1>, vector<8x128xf32>
    %c0_71 = arith.constant 0 : index
    %c0_72 = arith.constant 0 : index
    %171 = vector.load %arg18[%c0_71, %c0_72] : memref<1x56xbf16, #tpu.memory_space<vmem>>, vector<1x56xbf16>
    %c0_73 = arith.constant 0 : index
    %c0_74 = arith.constant 0 : index
    %172 = vector.load %arg19[%c0_73, %c0_74] : memref<1x1xf32, #tpu.memory_space<vmem>>, vector<1x1xf32>
    %cst_75 = arith.constant 0.000000e+00 : f32
    %173 = vector.broadcast %cst_75 : f32 to vector<8x3xf32>
    %174 = tpu.concatenate %173, %170, %173 in 1 : vector<8x3xf32>, vector<8x128xf32>, vector<8x3xf32> -> vector<8x134xf32>
    %175 = vector.extract_strided_slice %174 {offsets = [0, 0], sizes = [8, 128], strides = [1, 1]} : vector<8x134xf32> to vector<8x128xf32>
    %176 = vector.extract_strided_slice %174 {offsets = [0, 1], sizes = [8, 128], strides = [1, 1]} : vector<8x134xf32> to vector<8x128xf32>
    %177 = vector.extract_strided_slice %174 {offsets = [0, 2], sizes = [8, 128], strides = [1, 1]} : vector<8x134xf32> to vector<8x128xf32>
    %178 = vector.extract_strided_slice %174 {offsets = [0, 3], sizes = [8, 128], strides = [1, 1]} : vector<8x134xf32> to vector<8x128xf32>
    %179 = vector.extract_strided_slice %174 {offsets = [0, 4], sizes = [8, 128], strides = [1, 1]} : vector<8x134xf32> to vector<8x128xf32>
    %180 = vector.extract_strided_slice %174 {offsets = [0, 5], sizes = [8, 128], strides = [1, 1]} : vector<8x134xf32> to vector<8x128xf32>
    %181 = vector.extract_strided_slice %174 {offsets = [0, 6], sizes = [8, 128], strides = [1, 1]} : vector<8x134xf32> to vector<8x128xf32>
    %182 = tpu.concatenate %175, %176, %177, %178, %179, %180, %181 in 0 : vector<8x128xf32>, vector<8x128xf32>, vector<8x128xf32>, vector<8x128xf32>, vector<8x128xf32>, vector<8x128xf32>, vector<8x128xf32> -> vector<56x128xf32>
    %183 = arith.truncf %182 : vector<56x128xf32> to vector<56x128xbf16>
    %cst_76 = arith.constant dense<0.000000e+00> : vector<1x128xf32>
    %184 = tpu.matmul %171, %183, %cst_76 {dimension_numbers = #tpu.dot_dimension_numbers<[1], [0], [0], [1], [0, 0, 1, 1], [], []>} : vector<1x56xbf16>, vector<56x128xbf16>, vector<1x128xf32> -> vector<1x128xf32>
    %185 = vector.broadcast %172 : vector<1x1xf32> to vector<1x128xf32>
    %186 = arith.addf %184, %185 : vector<1x128xf32>
    %187 = math.tanh %186 : vector<1x128xf32>
    %c0_77 = arith.constant 0 : index
    %c0_78 = arith.constant 0 : index
    %c0_79 = arith.constant 0 : index
    %188 = vector.load %arg20[%c0_77, %c0_78, %c0_79] : memref<1x1x128xf32, #tpu.memory_space<vmem>>, vector<1x1x128xf32>
    %189 = vector.shape_cast %188 : vector<1x1x128xf32> to vector<1x128xf32>
    %190 = vector.shape_cast %187 : vector<1x128xf32> to vector<1x1x128xf32>
    tpu.vector_store %arg20[%c0_77, %c0_78, %c0_79], %190 {strides = array<i32>} : memref<1x1x128xf32, #tpu.memory_space<vmem>>, vector<1x1x128xf32>,
    return
  }
  func.func @transform_0(%arg0: i32) -> (i32, i32, i32) {
    %c0_i32 = arith.constant 0 : i32
    %c0_i32_0 = arith.constant 0 : i32
    %c0_i32_1 = arith.constant 0 : i32
    return %arg0, %c0_i32, %c0_i32_0 : i32, i32, i32
  }
  func.func @transform_1(%arg0: i32) -> (i32, i32) {
    %c0_i32 = arith.constant 0 : i32
    %c0_i32_0 = arith.constant 0 : i32
    %c0_i32_1 = arith.constant 0 : i32
    return %c0_i32, %c0_i32_0 : i32, i32
  }
  func.func @transform_2(%arg0: i32) -> (i32, i32) {
    %c0_i32 = arith.constant 0 : i32
    %c0_i32_0 = arith.constant 0 : i32
    %c0_i32_1 = arith.constant 0 : i32
    return %c0_i32, %c0_i32_0 : i32, i32
  }
  func.func @transform_3(%arg0: i32) -> (i32, i32) {
    %c0_i32 = arith.constant 0 : i32
    %c0_i32_0 = arith.constant 0 : i32
    %c0_i32_1 = arith.constant 0 : i32
    return %c0_i32, %c0_i32_0 : i32, i32
  }
  func.func @transform_4(%arg0: i32) -> (i32, i32) {
    %c0_i32 = arith.constant 0 : i32
    %c0_i32_0 = arith.constant 0 : i32
    %c0_i32_1 = arith.constant 0 : i32
    return %c0_i32, %c0_i32_0 : i32, i32
  }
  func.func @transform_5(%arg0: i32) -> (i32, i32) {
    %c0_i32 = arith.constant 0 : i32
    %c0_i32_0 = arith.constant 0 : i32
    %c0_i32_1 = arith.constant 0 : i32
    return %c0_i32, %c0_i32_0 : i32, i32
  }
  func.func @transform_6(%arg0: i32) -> (i32, i32) {
    %c0_i32 = arith.constant 0 : i32
    %c0_i32_0 = arith.constant 0 : i32
    %c0_i32_1 = arith.constant 0 : i32
    return %c0_i32, %c0_i32_0 : i32, i32
  }
  func.func @transform_7(%arg0: i32) -> (i32, i32) {
    %c0_i32 = arith.constant 0 : i32
    %c0_i32_0 = arith.constant 0 : i32
    %c0_i32_1 = arith.constant 0 : i32
    return %c0_i32, %c0_i32_0 : i32, i32
  }
  func.func @transform_8(%arg0: i32) -> (i32, i32) {
    %c0_i32 = arith.constant 0 : i32
    %c0_i32_0 = arith.constant 0 : i32
    %c0_i32_1 = arith.constant 0 : i32
    return %c0_i32, %c0_i32_0 : i32, i32
  }
  func.func @transform_9(%arg0: i32) -> (i32, i32) {
    %c0_i32 = arith.constant 0 : i32
    %c0_i32_0 = arith.constant 0 : i32
    %c0_i32_1 = arith.constant 0 : i32
    return %c0_i32, %c0_i32_0 : i32, i32
  }
  func.func @transform_10(%arg0: i32) -> (i32, i32) {
    %c0_i32 = arith.constant 0 : i32
    %c0_i32_0 = arith.constant 0 : i32
    %c0_i32_1 = arith.constant 0 : i32
    return %c0_i32, %c0_i32_0 : i32, i32
  }
  func.func @transform_11(%arg0: i32) -> (i32, i32) {
    %c0_i32 = arith.constant 0 : i32
    %c0_i32_0 = arith.constant 0 : i32
    %c0_i32_1 = arith.constant 0 : i32
    return %c0_i32, %c0_i32_0 : i32, i32
  }
  func.func @transform_12(%arg0: i32) -> (i32, i32) {
    %c0_i32 = arith.constant 0 : i32
    %c0_i32_0 = arith.constant 0 : i32
    %c0_i32_1 = arith.constant 0 : i32
    return %c0_i32, %c0_i32_0 : i32, i32
  }
  func.func @transform_13(%arg0: i32) -> (i32, i32) {
    %c0_i32 = arith.constant 0 : i32
    %c0_i32_0 = arith.constant 0 : i32
    %c0_i32_1 = arith.constant 0 : i32
    return %c0_i32, %c0_i32_0 : i32, i32
  }
  func.func @transform_14(%arg0: i32) -> (i32, i32) {
    %c0_i32 = arith.constant 0 : i32
    %c0_i32_0 = arith.constant 0 : i32
    %c0_i32_1 = arith.constant 0 : i32
    return %c0_i32, %c0_i32_0 : i32, i32
  }
  func.func @transform_15(%arg0: i32) -> (i32, i32) {
    %c0_i32 = arith.constant 0 : i32
    %c0_i32_0 = arith.constant 0 : i32
    %c0_i32_1 = arith.constant 0 : i32
    return %c0_i32, %c0_i32_0 : i32, i32
  }
  func.func @transform_16(%arg0: i32) -> (i32, i32) {
    %c0_i32 = arith.constant 0 : i32
    %c0_i32_0 = arith.constant 0 : i32
    %c0_i32_1 = arith.constant 0 : i32
    return %c0_i32, %c0_i32_0 : i32, i32
  }
  func.func @transform_17(%arg0: i32) -> (i32, i32) {
    %c0_i32 = arith.constant 0 : i32
    %c0_i32_0 = arith.constant 0 : i32
    %c0_i32_1 = arith.constant 0 : i32
    return %c0_i32, %c0_i32_0 : i32, i32
  }
  func.func @transform_18(%arg0: i32) -> (i32, i32) {
    %c0_i32 = arith.constant 0 : i32
    %c0_i32_0 = arith.constant 0 : i32
    %c0_i32_1 = arith.constant 0 : i32
    return %c0_i32, %c0_i32_0 : i32, i32
  }
  func.func @transform_19(%arg0: i32) -> (i32, i32, i32) {
    %c0_i32 = arith.constant 0 : i32
    %c0_i32_0 = arith.constant 0 : i32
    %c0_i32_1 = arith.constant 0 : i32
    return %arg0, %c0_i32, %c0_i32_0 : i32, i32, i32
  }
}

</mosaic_0001>

<llo_original>
// kernel: inference_vocoder.1
$region0: #{inference_vocoder.1}
  #allocation0 [shape = 'u32[]', space=smem, size = 0x4, offset = 0x4, fixed_abs, tag = 'smem constant byte address 0x4 - core index']
  #allocation1 [shape = 'u32[144,128]{1,0:T(1,128)}', space=vmem, size = 0x12000, scoped, tag = 'internal scratch']
  #allocation2 [shape = 'f32[1,1]{1,0:T(1,128)S(1)}', space=vmem, size = 0x200, scoped, tag = 'scoped memory for inference_vocoder.1']
  %s0 = inlined_call_operand.hbm [shape: f32[2,16,32], index: 0, kind: input, shape index: {}]
  %s1 = inlined_call_operand.hbm [shape: bf16[32,112], index: 1, kind: input, shape index: {}]
  %s2 = inlined_call_operand.hbm [shape: f32[32,1], index: 2, kind: input, shape index: {}]
  %s3 = inlined_call_operand.hbm [shape: bf16[16,64], index: 3, kind: input, shape index: {}]
  %s4 = inlined_call_operand.hbm [shape: bf16[16,64], index: 4, kind: input, shape index: {}]
  %s5 = inlined_call_operand.hbm [shape: f32[16,1], index: 5, kind: input, shape index: {}]
  %s6 = inlined_call_operand.hbm [shape: bf16[16,48], index: 6, kind: input, shape index: {}]
  %s7 = inlined_call_operand.hbm [shape: f32[16,1], index: 7, kind: input, shape index: {}]
  %s8 = inlined_call_operand.hbm [shape: bf16[16,48], index: 8, kind: input, shape index: {}]
  %s9 = inlined_call_operand.vmem [shape: f32[16,1], index: 9, kind: input, shape index: {}]
  %s10 = inlined_call_operand.hbm [shape: bf16[8,32], index: 10, kind: input, shape index: {}]
  %s11 = inlined_call_operand.hbm [shape: bf16[8,32], index: 11, kind: input, shape index: {}]
  %s12 = inlined_call_operand.hbm [shape: f32[8,1], index: 12, kind: input, shape index: {}]
  %s13 = inlined_call_operand.hbm [shape: bf16[8,24], index: 13, kind: input, shape index: {}]
  %s14 = inlined_call_operand.hbm [shape: f32[8,1], index: 14, kind: input, shape index: {}]
  %s15 = inlined_call_operand.vmem [shape: bf16[8,24], index: 15, kind: input, shape index: {}]
  %s16 = inlined_call_operand.vmem [shape: f32[8,1], index: 16, kind: input, shape index: {}]
  %s17 = inlined_call_operand.vmem [shape: bf16[1,56], index: 17, kind: input, shape index: {}]
  %s18 = inlined_call_operand.<no memory space> [shape: f32[1,1], index: 18, kind: input, shape index: {}]
  %s19 = inlined_call_operand.hbm [shape: f32[2,1,128], index: 19, kind: output, shape index: {}]
  %s20 = sld [smem:[#allocation0]]
  $region165: #{inference_vocoder.1} parent=0
    _
  %s22 = ssub.s32 1, %s20
  %s23 = scalar_select 0, %s22, %s20
  %v24 = vstv %s18
  %25 = vst [vmem:[#allocation2] sm:$0x1] %v24
  $region1: #{inference_vocoder.1} parent=0
    #allocation3 [shape = 'u8[16384]{0}', space=vmem, size = 0x4000, scoped, tag = 'input window, operand 0']
    #allocation4 [shape = 's32[2]{0}', space=sflag, size = 0x8, scoped, tag = 'scoped memory for inference_vocoder.1']
    #allocation5 [shape = 's32[2]{0}', space=sflag, size = 0x8, scoped, tag = 'scoped memory for inference_vocoder.1']
    #allocation6 [shape = 'u8[8192]{0}', space=vmem, size = 0x2000, scoped, tag = 'input window, operand 1, single buffered']
    #allocation7 [shape = 's32[1]{0}', space=sflag, size = 0x4, scoped, tag = 'scoped memory for inference_vocoder.1']
    #allocation8 [shape = 'u8[16384]{0}', space=vmem, size = 0x4000, scoped, tag = 'input window, operand 2, single buffered']
    #allocation9 [shape = 'u8[4096]{0}', space=vmem, size = 0x1000, scoped, tag = 'input window, operand 3, single buffered']
    #allocation10 [shape = 's32[1]{0}', space=sflag, size = 0x4, scoped, tag = 'scoped memory for inference_vocoder.1']
    #allocation11 [shape = 'u8[4096]{0}', space=vmem, size = 0x1000, scoped, tag = 'input window, operand 4, single buffered']
    #allocation12 [shape = 'u8[8192]{0}', space=vmem, size = 0x2000, scoped, tag = 'input window, operand 5, single buffered']
    #allocation13 [shape = 's32[1]{0}', space=sflag, size = 0x4, scoped, tag = 'scoped memory for inference_vocoder.1']
    #allocation14 [shape = 'u8[4096]{0}', space=vmem, size = 0x1000, scoped, tag = 'input window, operand 6, single buffered']
    #allocation15 [shape = 'u8[8192]{0}', space=vmem, size = 0x2000, scoped, tag = 'input window, operand 7, single buffered']
    #allocation16 [shape = 's32[1]{0}', space=sflag, size = 0x4, scoped, tag = 'scoped memory for inference_vocoder.1']
    #allocation17 [shape = 'u8[4096]{0}', space=vmem, size = 0x1000, scoped, tag = 'input window, operand 8, single buffered']
    #allocation18 [shape = 'u8[2048]{0}', space=vmem, size = 0x800, scoped, tag = 'input window, operand 10, single buffered']
    #allocation19 [shape = 's32[1]{0}', space=sflag, size = 0x4, scoped, tag = 'scoped memory for inference_vocoder.1']
    #allocation20 [shape = 'u8[2048]{0}', space=vmem, size = 0x800, scoped, tag = 'input window, operand 11, single buffered']
    #allocation21 [shape = 'u8[4096]{0}', space=vmem, size = 0x1000, scoped, tag = 'input window, operand 12, single buffered']
    #allocation22 [shape = 's32[1]{0}', space=sflag, size = 0x4, scoped, tag = 'scoped memory for inference_vocoder.1']
    #allocation23 [shape = 'u8[2048]{0}', space=vmem, size = 0x800, scoped, tag = 'input window, operand 13, single buffered']
    #allocation24 [shape = 'u8[4096]{0}', space=vmem, size = 0x1000, scoped, tag = 'input window, operand 14, single buffered']
    #allocation25 [shape = 's32[1]{0}', space=sflag, size = 0x4, scoped, tag = 'scoped memory for inference_vocoder.1']
    #allocation26 [shape = 'u8[1024]{0}', space=vmem, size = 0x400, scoped, tag = 'output window, operand 0']
    %26 = vsyncpa [#allocation4], 0
    %s27 = scalar_lea.sflag [#allocation4], 1
    %28 = vsyncpa %s27, 0
    %29 = vsyncpa [#allocation7], 0
    %30 = vsyncpa [#allocation10], 0
    %31 = vsyncpa [#allocation13], 0
    %32 = vsyncpa [#allocation16], 0
    %33 = vsyncpa [#allocation19], 0
    %34 = vsyncpa [#allocation22], 0
    %35 = vsyncpa [#allocation25], 0
    %36 = vsyncpa [#allocation5], 0
    %s37 = scalar_lea.sflag [#allocation5], 1
    %38 = vsyncpa %s37, 0
    loop: start=0, step=1, limit=4
    $region2: #{inference_vocoder.1} parent=1 // loop_pre_header
      _
    $region3: #{inference_vocoder.1} parent=1 // loop_header
      %s40 = sphi 0, %s44
      %p41 = scmp.ge.s32.totalorder %s40, 4
      %s50 = sphi 0, %s52
      %s53 = sphi 0, %s50
      %s54 = sphi 0, %s53
      %s70 = sphi 0, %s54
      %s74 = sphi 0, %s74
      %s76 = sphi 0, %s74
      %s77 = sphi 0, %s76
      %s91 = sphi 0, %s77
      %s95 = sphi 0, %s95
      %s97 = sphi 0, %s95
      %s98 = sphi 0, %s97
      %s112 = sphi 0, %s98
      %s116 = sphi 0, %s116
      %s118 = sphi 0, %s116
      %s119 = sphi 0, %s118
      %s133 = sphi 0, %s119
      %s137 = sphi 0, %s137
      %s139 = sphi 0, %s137
      %s140 = sphi 0, %s139
      %s154 = sphi 0, %s140
      %s158 = sphi 0, %s158
      %s160 = sphi 0, %s158
      %s161 = sphi 0, %s160
      %s175 = sphi 0, %s161
      %s179 = sphi 0, %s179
      %s181 = sphi 0, %s179
      %s182 = sphi 0, %s181
      %s196 = sphi 0, %s182
      %s200 = sphi 0, %s200
      %s202 = sphi 0, %s200
      %s203 = sphi 0, %s202
      %s217 = sphi 0, %s203
      %s221 = sphi 0, %s221
      %s223 = sphi 0, %s221
      %s224 = sphi 0, %s223
      %s238 = sphi 0, %s224
      %s242 = sphi 0, %s242
      %s244 = sphi 0, %s242
      %s245 = sphi 0, %s244
      %s259 = sphi 0, %s245
      %s263 = sphi 0, %s263
      %s265 = sphi 0, %s263
      %s266 = sphi 0, %s265
      %s280 = sphi 0, %s266
      %s284 = sphi 0, %s284
      %s286 = sphi 0, %s284
      %s287 = sphi 0, %s286
      %s301 = sphi 0, %s287
      %s305 = sphi 0, %s305
      %s307 = sphi 0, %s305
      %s308 = sphi 0, %s307
      %s322 = sphi 0, %s308
      %s326 = sphi 0, %s326
      %s328 = sphi 0, %s326
      %s329 = sphi 0, %s328
      %s343 = sphi 0, %s329
      %s347 = sphi 0, %s347
      %s349 = sphi 0, %s347
      %s350 = sphi 0, %s349
      %s364 = sphi 0, %s350
      %s368 = sphi 0, %s368
      %s370 = sphi 0, %s368
      %s371 = sphi 0, %s370
      %s385 = sphi 0, %s371
      %s389 = sphi 0, %s389
      %s391 = sphi 0, %s389
      %s392 = sphi 0, %s391
      %s406 = sphi 0, %s392
      %s410 = sphi 0, %s410
      %s412 = sphi 0, %s410
      %s413 = sphi 0, %s412
      %s427 = sphi 0, %s413
      %s431 = sphi 0, %s431
      %s433 = sphi 0, %s431
      %s434 = sphi 0, %s433
      %s448 = sphi 0, %s434
      %s454 = sphi 0, %s456
      %s457 = sphi 0, %s454
      %s458 = sphi 0, %s457
      %s474 = sphi 0, %s458
    $region4: #{inference_vocoder.1} parent=1 // loop_header_branch
      %43 = sbr.rel (%p41) target = $region8
    $region5: #{inference_vocoder.1} parent=1 // loop_body
      %s45 = ssub.s32 %s40, 1
      %s46 = ssub.s32 %s40, 2
      %s47 = sadd.s32 %s40, 1
      %s48 = ssub.s32 %s40, %s47
      %p49 = scmp.eq.s32.totalorder %s48, 0
      %s51 = sadd.s32 %s50, 1
      %s52 = scalar_select %p49, %s50, %s51
      %p55 = pneg %p49
      %p56 = scmp.eq.s32.totalorder %s40, 1
      %p57 = por %p55, %p56
      %p58 = scmp.ne.s32.totalorder %s50, %s53
      %p59 = scmp.eq.s32.totalorder %s40, 0
      %p60 = por %p58, %p59
      %p61 = scmp.ne.s32.totalorder %s50, %s53
      %p62 = scmp.eq.s32.totalorder %s45, 1
      %p63 = por %p61, %p62
      %p64 = scmp.ne.s32.totalorder %s53, %s54
      %p65 = scmp.eq.s32.totalorder %s45, 0
      %p66 = por %p64, %p65
      %p67 = scmp.ne.s32.totalorder %s53, %s54
      %p68 = scmp.eq.s32.totalorder %s46, 1
      %p69 = por %p67, %p68
      %p71 = scmp.ne.s32.totalorder %s54, %s70
      %p72 = scmp.eq.s32.totalorder %s46, 0
      %p73 = por %p71, %p72
      %s75 = sadd.s32 %s74, 1
      %p78 = scmp.eq.s32.totalorder %s40, 1
      %p79 = scmp.ne.s32.totalorder %s74, %s76
      %p80 = scmp.eq.s32.totalorder %s40, 0
      %p81 = por %p79, %p80
      %p82 = scmp.ne.s32.totalorder %s74, %s76
      %p83 = scmp.eq.s32.totalorder %s45, 1
      %p84 = por %p82, %p83
      %p85 = scmp.ne.s32.totalorder %s76, %s77
      %p86 = scmp.eq.s32.totalorder %s45, 0
      %p87 = por %p85, %p86
      %p88 = scmp.ne.s32.totalorder %s76, %s77
      %p89 = scmp.eq.s32.totalorder %s46, 1
      %p90 = por %p88, %p89
      %p92 = scmp.ne.s32.totalorder %s77, %s91
      %p93 = scmp.eq.s32.totalorder %s46, 0
      %p94 = por %p92, %p93
      %s96 = sadd.s32 %s95, 1
      %p99 = scmp.eq.s32.totalorder %s40, 1
      %p100 = scmp.ne.s32.totalorder %s95, %s97
      %p101 = scmp.eq.s32.totalorder %s40, 0
      %p102 = por %p100, %p101
      %p103 = scmp.ne.s32.totalorder %s95, %s97
      %p104 = scmp.eq.s32.totalorder %s45, 1
      %p105 = por %p103, %p104
      %p106 = scmp.ne.s32.totalorder %s97, %s98
      %p107 = scmp.eq.s32.totalorder %s45, 0
      %p108 = por %p106, %p107
      %p109 = scmp.ne.s32.totalorder %s97, %s98
      %p110 = scmp.eq.s32.totalorder %s46, 1
      %p111 = por %p109, %p110
      %p113 = scmp.ne.s32.totalorder %s98, %s112
      %p114 = scmp.eq.s32.totalorder %s46, 0
      %p115 = por %p113, %p114
      %s117 = sadd.s32 %s116, 1
      %p120 = scmp.eq.s32.totalorder %s40, 1
      %p121 = scmp.ne.s32.totalorder %s116, %s118
      %p122 = scmp.eq.s32.totalorder %s40, 0
      %p123 = por %p121, %p122
      %p124 = scmp.ne.s32.totalorder %s116, %s118
      %p125 = scmp.eq.s32.totalorder %s45, 1
      %p126 = por %p124, %p125
      %p127 = scmp.ne.s32.totalorder %s118, %s119
      %p128 = scmp.eq.s32.totalorder %s45, 0
      %p129 = por %p127, %p128
      %p130 = scmp.ne.s32.totalorder %s118, %s119
      %p131 = scmp.eq.s32.totalorder %s46, 1
      %p132 = por %p130, %p131
      %p134 = scmp.ne.s32.totalorder %s119, %s133
      %p135 = scmp.eq.s32.totalorder %s46, 0
      %p136 = por %p134, %p135
      %s138 = sadd.s32 %s137, 1
      %p141 = scmp.eq.s32.totalorder %s40, 1
      %p142 = scmp.ne.s32.totalorder %s137, %s139
      %p143 = scmp.eq.s32.totalorder %s40, 0
      %p144 = por %p142, %p143
      %p145 = scmp.ne.s32.totalorder %s137, %s139
      %p146 = scmp.eq.s32.totalorder %s45, 1
      %p147 = por %p145, %p146
      %p148 = scmp.ne.s32.totalorder %s139, %s140
      %p149 = scmp.eq.s32.totalorder %s45, 0
      %p150 = por %p148, %p149
      %p151 = scmp.ne.s32.totalorder %s139, %s140
      %p152 = scmp.eq.s32.totalorder %s46, 1
      %p153 = por %p151, %p152
      %p155 = scmp.ne.s32.totalorder %s140, %s154
      %p156 = scmp.eq.s32.totalorder %s46, 0
      %p157 = por %p155, %p156
      %s159 = sadd.s32 %s158, 1
      %p162 = scmp.eq.s32.totalorder %s40, 1
      %p163 = scmp.ne.s32.totalorder %s158, %s160
      %p164 = scmp.eq.s32.totalorder %s40, 0
      %p165 = por %p163, %p164
      %p166 = scmp.ne.s32.totalorder %s158, %s160
      %p167 = scmp.eq.s32.totalorder %s45, 1
      %p168 = por %p166, %p167
      %p169 = scmp.ne.s32.totalorder %s160, %s161
      %p170 = scmp.eq.s32.totalorder %s45, 0
      %p171 = por %p169, %p170
      %p172 = scmp.ne.s32.totalorder %s160, %s161
      %p173 = scmp.eq.s32.totalorder %s46, 1
      %p174 = por %p172, %p173
      %p176 = scmp.ne.s32.totalorder %s161, %s175
      %p177 = scmp.eq.s32.totalorder %s46, 0
      %p178 = por %p176, %p177
      %s180 = sadd.s32 %s179, 1
      %p183 = scmp.eq.s32.totalorder %s40, 1
      %p184 = scmp.ne.s32.totalorder %s179, %s181
      %p185 = scmp.eq.s32.totalorder %s40, 0
      %p186 = por %p184, %p185
      %p187 = scmp.ne.s32.totalorder %s179, %s181
      %p188 = scmp.eq.s32.totalorder %s45, 1
      %p189 = por %p187, %p188
      %p190 = scmp.ne.s32.totalorder %s181, %s182
      %p191 = scmp.eq.s32.totalorder %s45, 0
      %p192 = por %p190, %p191
      %p193 = scmp.ne.s32.totalorder %s181, %s182
      %p194 = scmp.eq.s32.totalorder %s46, 1
      %p195 = por %p193, %p194
      %p197 = scmp.ne.s32.totalorder %s182, %s196
      %p198 = scmp.eq.s32.totalorder %s46, 0
      %p199 = por %p197, %p198
      %s201 = sadd.s32 %s200, 1
      %p204 = scmp.eq.s32.totalorder %s40, 1
      %p205 = scmp.ne.s32.totalorder %s200, %s202
      %p206 = scmp.eq.s32.totalorder %s40, 0
      %p207 = por %p205, %p206
      %p208 = scmp.ne.s32.totalorder %s200, %s202
      %p209 = scmp.eq.s32.totalorder %s45, 1
      %p210 = por %p208, %p209
      %p211 = scmp.ne.s32.totalorder %s202, %s203
      %p212 = scmp.eq.s32.totalorder %s45, 0
      %p213 = por %p211, %p212
      %p214 = scmp.ne.s32.totalorder %s202, %s203
      %p215 = scmp.eq.s32.totalorder %s46, 1
      %p216 = por %p214, %p215
      %p218 = scmp.ne.s32.totalorder %s203, %s217
      %p219 = scmp.eq.s32.totalorder %s46, 0
      %p220 = por %p218, %p219
      %s222 = sadd.s32 %s221, 1
      %p225 = scmp.eq.s32.totalorder %s40, 1
      %p226 = scmp.ne.s32.totalorder %s221, %s223
      %p227 = scmp.eq.s32.totalorder %s40, 0
      %p228 = por %p226, %p227
      %p229 = scmp.ne.s32.totalorder %s221, %s223
      %p230 = scmp.eq.s32.totalorder %s45, 1
      %p231 = por %p229, %p230
      %p232 = scmp.ne.s32.totalorder %s223, %s224
      %p233 = scmp.eq.s32.totalorder %s45, 0
      %p234 = por %p232, %p233
      %p235 = scmp.ne.s32.totalorder %s223, %s224
      %p236 = scmp.eq.s32.totalorder %s46, 1
      %p237 = por %p235, %p236
      %p239 = scmp.ne.s32.totalorder %s224, %s238
      %p240 = scmp.eq.s32.totalorder %s46, 0
      %p241 = por %p239, %p240
      %s243 = sadd.s32 %s242, 1
      %p246 = scmp.eq.s32.totalorder %s40, 1
      %p247 = scmp.ne.s32.totalorder %s242, %s244
      %p248 = scmp.eq.s32.totalorder %s40, 0
      %p249 = por %p247, %p248
      %p250 = scmp.ne.s32.totalorder %s242, %s244
      %p251 = scmp.eq.s32.totalorder %s45, 1
      %p252 = por %p250, %p251
      %p253 = scmp.ne.s32.totalorder %s244, %s245
      %p254 = scmp.eq.s32.totalorder %s45, 0
      %p255 = por %p253, %p254
      %p256 = scmp.ne.s32.totalorder %s244, %s245
      %p257 = scmp.eq.s32.totalorder %s46, 1
      %p258 = por %p256, %p257
      %p260 = scmp.ne.s32.totalorder %s245, %s259
      %p261 = scmp.eq.s32.totalorder %s46, 0
      %p262 = por %p260, %p261
      %s264 = sadd.s32 %s263, 1
      %p267 = scmp.eq.s32.totalorder %s40, 1
      %p268 = scmp.ne.s32.totalorder %s263, %s265
      %p269 = scmp.eq.s32.totalorder %s40, 0
      %p270 = por %p268, %p269
      %p271 = scmp.ne.s32.totalorder %s263, %s265
      %p272 = scmp.eq.s32.totalorder %s45, 1
      %p273 = por %p271, %p272
      %p274 = scmp.ne.s32.totalorder %s265, %s266
      %p275 = scmp.eq.s32.totalorder %s45, 0
      %p276 = por %p274, %p275
      %p277 = scmp.ne.s32.totalorder %s265, %s266
      %p278 = scmp.eq.s32.totalorder %s46, 1
      %p279 = por %p277, %p278
      %p281 = scmp.ne.s32.totalorder %s266, %s280
      %p282 = scmp.eq.s32.totalorder %s46, 0
      %p283 = por %p281, %p282
      %s285 = sadd.s32 %s284, 1
      %p288 = scmp.eq.s32.totalorder %s40, 1
      %p289 = scmp.ne.s32.totalorder %s284, %s286
      %p290 = scmp.eq.s32.totalorder %s40, 0
      %p291 = por %p289, %p290
      %p292 = scmp.ne.s32.totalorder %s284, %s286
      %p293 = scmp.eq.s32.totalorder %s45, 1
      %p294 = por %p292, %p293
      %p295 = scmp.ne.s32.totalorder %s286, %s287
      %p296 = scmp.eq.s32.totalorder %s45, 0
      %p297 = por %p295, %p296
      %p298 = scmp.ne.s32.totalorder %s286, %s287
      %p299 = scmp.eq.s32.totalorder %s46, 1
      %p300 = por %p298, %p299
      %p302 = scmp.ne.s32.totalorder %s287, %s301
      %p303 = scmp.eq.s32.totalorder %s46, 0
      %p304 = por %p302, %p303
      %s306 = sadd.s32 %s305, 1
      %p309 = scmp.eq.s32.totalorder %s40, 1
      %p310 = scmp.ne.s32.totalorder %s305, %s307
      %p311 = scmp.eq.s32.totalorder %s40, 0
      %p312 = por %p310, %p311
      %p313 = scmp.ne.s32.totalorder %s305, %s307
      %p314 = scmp.eq.s32.totalorder %s45, 1
      %p315 = por %p313, %p314
      %p316 = scmp.ne.s32.totalorder %s307, %s308
      %p317 = scmp.eq.s32.totalorder %s45, 0
      %p318 = por %p316, %p317
      %p319 = scmp.ne.s32.totalorder %s307, %s308
      %p320 = scmp.eq.s32.totalorder %s46, 1
      %p321 = por %p319, %p320
      %p323 = scmp.ne.s32.totalorder %s308, %s322
      %p324 = scmp.eq.s32.totalorder %s46, 0
      %p325 = por %p323, %p324
      %s327 = sadd.s32 %s326, 1
      %p330 = scmp.eq.s32.totalorder %s40, 1
      %p331 = scmp.ne.s32.totalorder %s326, %s328
      %p332 = scmp.eq.s32.totalorder %s40, 0
      %p333 = por %p331, %p332
      %p334 = scmp.ne.s32.totalorder %s326, %s328
      %p335 = scmp.eq.s32.totalorder %s45, 1
      %p336 = por %p334, %p335
      %p337 = scmp.ne.s32.totalorder %s328, %s329
      %p338 = scmp.eq.s32.totalorder %s45, 0
      %p339 = por %p337, %p338
      %p340 = scmp.ne.s32.totalorder %s328, %s329
      %p341 = scmp.eq.s32.totalorder %s46, 1
      %p342 = por %p340, %p341
      %p344 = scmp.ne.s32.totalorder %s329, %s343
      %p345 = scmp.eq.s32.totalorder %s46, 0
      %p346 = por %p344, %p345
      %s348 = sadd.s32 %s347, 1
      %p351 = scmp.eq.s32.totalorder %s40, 1
      %p352 = scmp.ne.s32.totalorder %s347, %s349
      %p353 = scmp.eq.s32.totalorder %s40, 0
      %p354 = por %p352, %p353
      %p355 = scmp.ne.s32.totalorder %s347, %s349
      %p356 = scmp.eq.s32.totalorder %s45, 1
      %p357 = por %p355, %p356
      %p358 = scmp.ne.s32.totalorder %s349, %s350
      %p359 = scmp.eq.s32.totalorder %s45, 0
      %p360 = por %p358, %p359
      %p361 = scmp.ne.s32.totalorder %s349, %s350
      %p362 = scmp.eq.s32.totalorder %s46, 1
      %p363 = por %p361, %p362
      %p365 = scmp.ne.s32.totalorder %s350, %s364
      %p366 = scmp.eq.s32.totalorder %s46, 0
      %p367 = por %p365, %p366
      %s369 = sadd.s32 %s368, 1
      %p372 = scmp.eq.s32.totalorder %s40, 1
      %p373 = scmp.ne.s32.totalorder %s368, %s370
      %p374 = scmp.eq.s32.totalorder %s40, 0
      %p375 = por %p373, %p374
      %p376 = scmp.ne.s32.totalorder %s368, %s370
      %p377 = scmp.eq.s32.totalorder %s45, 1
      %p378 = por %p376, %p377
      %p379 = scmp.ne.s32.totalorder %s370, %s371
      %p380 = scmp.eq.s32.totalorder %s45, 0
      %p381 = por %p379, %p380
      %p382 = scmp.ne.s32.totalorder %s370, %s371
      %p383 = scmp.eq.s32.totalorder %s46, 1
      %p384 = por %p382, %p383
      %p386 = scmp.ne.s32.totalorder %s371, %s385
      %p387 = scmp.eq.s32.totalorder %s46, 0
      %p388 = por %p386, %p387
      %s390 = sadd.s32 %s389, 1
      %p393 = scmp.eq.s32.totalorder %s40, 1
      %p394 = scmp.ne.s32.totalorder %s389, %s391
      %p395 = scmp.eq.s32.totalorder %s40, 0
      %p396 = por %p394, %p395
      %p397 = scmp.ne.s32.totalorder %s389, %s391
      %p398 = scmp.eq.s32.totalorder %s45, 1
      %p399 = por %p397, %p398
      %p400 = scmp.ne.s32.totalorder %s391, %s392
      %p401 = scmp.eq.s32.totalorder %s45, 0
      %p402 = por %p400, %p401
      %p403 = scmp.ne.s32.totalorder %s391, %s392
      %p404 = scmp.eq.s32.totalorder %s46, 1
      %p405 = por %p403, %p404
      %p407 = scmp.ne.s32.totalorder %s392, %s406
      %p408 = scmp.eq.s32.totalorder %s46, 0
      %p409 = por %p407, %p408
      %s411 = sadd.s32 %s410, 1
      %p414 = scmp.eq.s32.totalorder %s40, 1
      %p415 = scmp.ne.s32.totalorder %s410, %s412
      %p416 = scmp.eq.s32.totalorder %s40, 0
      %p417 = por %p415, %p416
      %p418 = scmp.ne.s32.totalorder %s410, %s412
      %p419 = scmp.eq.s32.totalorder %s45, 1
      %p420 = por %p418, %p419
      %p421 = scmp.ne.s32.totalorder %s412, %s413
      %p422 = scmp.eq.s32.totalorder %s45, 0
      %p423 = por %p421, %p422
      %p424 = scmp.ne.s32.totalorder %s412, %s413
      %p425 = scmp.eq.s32.totalorder %s46, 1
      %p426 = por %p424, %p425
      %p428 = scmp.ne.s32.totalorder %s413, %s427
      %p429 = scmp.eq.s32.totalorder %s46, 0
      %p430 = por %p428, %p429
      %s432 = sadd.s32 %s431, 1
      %p435 = scmp.eq.s32.totalorder %s40, 1
      %p436 = scmp.ne.s32.totalorder %s431, %s433
      %p437 = scmp.eq.s32.totalorder %s40, 0
      %p438 = por %p436, %p437
      %p439 = scmp.ne.s32.totalorder %s431, %s433
      %p440 = scmp.eq.s32.totalorder %s45, 1
      %p441 = por %p439, %p440
      %p442 = scmp.ne.s32.totalorder %s433, %s434
      %p443 = scmp.eq.s32.totalorder %s45, 0
      %p444 = por %p442, %p443
      %p445 = scmp.ne.s32.totalorder %s433, %s434
      %p446 = scmp.eq.s32.totalorder %s46, 1
      %p447 = por %p445, %p446
      %p449 = scmp.ne.s32.totalorder %s434, %s448
      %p450 = scmp.eq.s32.totalorder %s46, 0
      %p451 = por %p449, %p450
      %s452 = ssub.s32 %s40, %s47
      %p453 = scmp.eq.s32.totalorder %s452, 0
      %s455 = sadd.s32 %s454, 1
      %s456 = scalar_select %p453, %s454, %s455
      %p459 = pneg %p453
      %p460 = scmp.eq.s32.totalorder %s40, 1
      %p461 = por %p459, %p460
      %p462 = scmp.ne.s32.totalorder %s454, %s457
      %p463 = scmp.eq.s32.totalorder %s40, 0
      %p464 = por %p462, %p463
      %p465 = scmp.ne.s32.totalorder %s454, %s457
      %p466 = scmp.eq.s32.totalorder %s45, 1
      %p467 = por %p465, %p466
      %p468 = scmp.ne.s32.totalorder %s457, %s458
      %p469 = scmp.eq.s32.totalorder %s45, 0
      %p470 = por %p468, %p469
      %p471 = scmp.ne.s32.totalorder %s457, %s458
      %p472 = scmp.eq.s32.totalorder %s46, 1
      %p473 = por %p471, %p472
      %p475 = scmp.ne.s32.totalorder %s458, %s474
      %p476 = scmp.eq.s32.totalorder %s46, 0
      %p477 = por %p475, %p476
      %p478 = scmp.le.s32.totalorder 1, %s40
      %p479 = scmp.lt.s32.totalorder %s40, 3
      %p480 = pnand %p478, %p479
      %p481 = pneg %p480
      // Predicated region
      $region9: #{inference_vocoder.1} parent=5 // pred_check
        _
      $region10: #{inference_vocoder.1} parent=5 // pred_check_branch
        %483 = sbr.rel (%p480) target = $region12
      $region11: #{inference_vocoder.1} parent=5 // pred_region
        %s484 = ssub.s32 %s40, 1
        // Predicated region
        $region13: #{inference_vocoder.1} parent=11 // pred_check
          %p485 = pneg %p87
        $region14: #{inference_vocoder.1} parent=11 // pred_check_branch
          %487 = sbr.rel (%p485) target = $region16
        $region15: #{inference_vocoder.1} parent=11 // pred_region
          %s489 = ssub.s32 256, 256
          %490 = vsyncadd [#allocation7], %s489
          %s491 = sshll.u32 [#allocation6], 4
          %s492 = int_to_ptr.vmem [resolvable:$true] %s491
          %497 = dma.hbm_to_vmem [thread:$0]  %s1, 256, %s492, [#allocation7], 64, 64, 4
        $region16: #{inference_vocoder.1} parent=11 // pred_fallthru
          _
        // Predicated region
        $region17: #{inference_vocoder.1} parent=11 // pred_check
          %p498 = pneg %p108
        $region18: #{inference_vocoder.1} parent=11 // pred_check_branch
          %500 = sbr.rel (%p498) target = $region20
        $region19: #{inference_vocoder.1} parent=11 // pred_region
          %s502 = ssub.s32 512, 512
          %503 = vsyncadd [#allocation7], %s502
          %s504 = sshll.u32 [#allocation8], 4
          %s505 = int_to_ptr.vmem [resolvable:$true] %s504
          %510 = dma.hbm_to_vmem [thread:$0]  %s2, 512, %s505, [#allocation7], 128, 128, 8
        $region20: #{inference_vocoder.1} parent=11 // pred_fallthru
          _
        // Predicated region
        $region21: #{inference_vocoder.1} parent=11 // pred_check
          %p511 = pneg %p129
        $region22: #{inference_vocoder.1} parent=11 // pred_check_branch
          %513 = sbr.rel (%p511) target = $region24
        $region23: #{inference_vocoder.1} parent=11 // pred_region
          %s515 = ssub.s32 128, 128
          %516 = vsyncadd [#allocation10], %s515
          %s517 = sshll.u32 [#allocation9], 4
          %s518 = int_to_ptr.vmem [resolvable:$true] %s517
          %523 = dma.hbm_to_vmem [thread:$0]  %s3, 128, %s518, [#allocation10], 64, 64, 4
        $region24: #{inference_vocoder.1} parent=11 // pred_fallthru
          _
        // Predicated region
        $region25: #{inference_vocoder.1} parent=11 // pred_check
          %p524 = pneg %p150
        $region26: #{inference_vocoder.1} parent=11 // pred_check_branch
          %526 = sbr.rel (%p524) target = $region28
        $region27: #{inference_vocoder.1} parent=11 // pred_region
          %s528 = ssub.s32 128, 128
          %529 = vsyncadd [#allocation10], %s528
          %s530 = sshll.u32 [#allocation11], 4
          %s531 = int_to_ptr.vmem [resolvable:$true] %s530
          %536 = dma.hbm_to_vmem [thread:$0]  %s4, 128, %s531, [#allocation10], 64, 64, 4
        $region28: #{inference_vocoder.1} parent=11 // pred_fallthru
          _
        // Predicated region
        $region29: #{inference_vocoder.1} parent=11 // pred_check
          %p537 = pneg %p171
        $region30: #{inference_vocoder.1} parent=11 // pred_check_branch
          %539 = sbr.rel (%p537) target = $region32
        $region31: #{inference_vocoder.1} parent=11 // pred_region
          %s541 = ssub.s32 256, 256
          %542 = vsyncadd [#allocation13], %s541
          %s543 = sshll.u32 [#allocation12], 4
          %s544 = int_to_ptr.vmem [resolvable:$true] %s543
          %549 = dma.hbm_to_vmem [thread:$0]  %s5, 256, %s544, [#allocation13], 128, 128, 8
        $region32: #{inference_vocoder.1} parent=11 // pred_fallthru
          _
        // Predicated region
        $region33: #{inference_vocoder.1} parent=11 // pred_check
          %p550 = pneg %p192
        $region34: #{inference_vocoder.1} parent=11 // pred_check_branch
          %552 = sbr.rel (%p550) target = $region36
        $region35: #{inference_vocoder.1} parent=11 // pred_region
          %s554 = ssub.s32 128, 128
          %555 = vsyncadd [#allocation13], %s554
          %s556 = sshll.u32 [#allocation14], 4
          %s557 = int_to_ptr.vmem [resolvable:$true] %s556
          %562 = dma.hbm_to_vmem [thread:$0]  %s6, 128, %s557, [#allocation13], 64, 64, 4
        $region36: #{inference_vocoder.1} parent=11 // pred_fallthru
          _
        // Predicated region
        $region37: #{inference_vocoder.1} parent=11 // pred_check
          %p563 = pneg %p213
        $region38: #{inference_vocoder.1} parent=11 // pred_check_branch
          %565 = sbr.rel (%p563) target = $region40
        $region39: #{inference_vocoder.1} parent=11 // pred_region
          %s567 = ssub.s32 256, 256
          %568 = vsyncadd [#allocation16], %s567
          %s569 = sshll.u32 [#allocation15], 4
          %s570 = int_to_ptr.vmem [resolvable:$true] %s569
          %575 = dma.hbm_to_vmem [thread:$0]  %s7, 256, %s570, [#allocation16], 128, 128, 8
        $region40: #{inference_vocoder.1} parent=11 // pred_fallthru
          _
        // Predicated region
        $region41: #{inference_vocoder.1} parent=11 // pred_check
          %p576 = pneg %p234
        $region42: #{inference_vocoder.1} parent=11 // pred_check_branch
          %578 = sbr.rel (%p576) target = $region44
        $region43: #{inference_vocoder.1} parent=11 // pred_region
          %s580 = ssub.s32 128, 128
          %581 = vsyncadd [#allocation16], %s580
          %s582 = sshll.u32 [#allocation17], 4
          %s583 = int_to_ptr.vmem [resolvable:$true] %s582
          %588 = dma.hbm_to_vmem [thread:$0]  %s8, 128, %s583, [#allocation16], 64, 64, 4
        $region44: #{inference_vocoder.1} parent=11 // pred_fallthru
          _
        // Predicated region
        $region45: #{inference_vocoder.1} parent=11 // pred_check
          %p589 = pneg %p255
        $region46: #{inference_vocoder.1} parent=11 // pred_check_branch
          %591 = sbr.rel (%p589) target = $region48
        $region47: #{inference_vocoder.1} parent=11 // pred_region
          _
        $region48: #{inference_vocoder.1} parent=11 // pred_fallthru
          _
        // Predicated region
        $region49: #{inference_vocoder.1} parent=11 // pred_check
          %p592 = pneg %p276
        $region50: #{inference_vocoder.1} parent=11 // pred_check_branch
          %594 = sbr.rel (%p592) target = $region52
        $region51: #{inference_vocoder.1} parent=11 // pred_region
          %s596 = ssub.s32 64, 64
          %597 = vsyncadd [#allocation19], %s596
          %s599 = sshll.u32 [#allocation18], 4
          %s600 = int_to_ptr.vmem [resolvable:$true] %s599
          %602 = dma.hbm_to_vmem [thread:$0]  %s10, 64, %s600, [#allocation19]
        $region52: #{inference_vocoder.1} parent=11 // pred_fallthru
          _
        // Predicated region
        $region53: #{inference_vocoder.1} parent=11 // pred_check
          %p603 = pneg %p297
        $region54: #{inference_vocoder.1} parent=11 // pred_check_branch
          %605 = sbr.rel (%p603) target = $region56
        $region55: #{inference_vocoder.1} parent=11 // pred_region
          %s607 = ssub.s32 64, 64
          %608 = vsyncadd [#allocation19], %s607
          %s610 = sshll.u32 [#allocation20], 4
          %s611 = int_to_ptr.vmem [resolvable:$true] %s610
          %613 = dma.hbm_to_vmem [thread:$0]  %s11, 64, %s611, [#allocation19]
        $region56: #{inference_vocoder.1} parent=11 // pred_fallthru
          _
        // Predicated region
        $region57: #{inference_vocoder.1} parent=11 // pred_check
          %p614 = pneg %p318
        $region58: #{inference_vocoder.1} parent=11 // pred_check_branch
          %616 = sbr.rel (%p614) target = $region60
        $region59: #{inference_vocoder.1} parent=11 // pred_region
          %s618 = ssub.s32 128, 128
          %619 = vsyncadd [#allocation22], %s618
          %s621 = sshll.u32 [#allocation21], 4
          %s622 = int_to_ptr.vmem [resolvable:$true] %s621
          %624 = dma.hbm_to_vmem [thread:$0]  %s12, 128, %s622, [#allocation22]
        $region60: #{inference_vocoder.1} parent=11 // pred_fallthru
          _
        // Predicated region
        $region61: #{inference_vocoder.1} parent=11 // pred_check
          %p625 = pneg %p339
        $region62: #{inference_vocoder.1} parent=11 // pred_check_branch
          %627 = sbr.rel (%p625) target = $region64
        $region63: #{inference_vocoder.1} parent=11 // pred_region
          %s629 = ssub.s32 64, 64
          %630 = vsyncadd [#allocation22], %s629
          %s632 = sshll.u32 [#allocation23], 4
          %s633 = int_to_ptr.vmem [resolvable:$true] %s632
          %635 = dma.hbm_to_vmem [thread:$0]  %s13, 64, %s633, [#allocation22]
        $region64: #{inference_vocoder.1} parent=11 // pred_fallthru
          _
        // Predicated region
        $region65: #{inference_vocoder.1} parent=11 // pred_check
          %p636 = pneg %p360
        $region66: #{inference_vocoder.1} parent=11 // pred_check_branch
          %638 = sbr.rel (%p636) target = $region68
        $region67: #{inference_vocoder.1} parent=11 // pred_region
          %s640 = ssub.s32 128, 128
          %641 = vsyncadd [#allocation25], %s640
          %s643 = sshll.u32 [#allocation24], 4
          %s644 = int_to_ptr.vmem [resolvable:$true] %s643
          %646 = dma.hbm_to_vmem [thread:$0]  %s14, 128, %s644, [#allocation25]
        $region68: #{inference_vocoder.1} parent=11 // pred_fallthru
          _
        // Predicated region
        $region69: #{inference_vocoder.1} parent=11 // pred_check
          %p647 = pneg %p381
        $region70: #{inference_vocoder.1} parent=11 // pred_check_branch
          %649 = sbr.rel (%p647) target = $region72
        $region71: #{inference_vocoder.1} parent=11 // pred_region
          _
        $region72: #{inference_vocoder.1} parent=11 // pred_fallthru
          _
        // Predicated region
        $region73: #{inference_vocoder.1} parent=11 // pred_check
          %p650 = pneg %p402
        $region74: #{inference_vocoder.1} parent=11 // pred_check_branch
          %652 = sbr.rel (%p650) target = $region76
        $region75: #{inference_vocoder.1} parent=11 // pred_region
          _
        $region76: #{inference_vocoder.1} parent=11 // pred_fallthru
          _
        // Predicated region
        $region77: #{inference_vocoder.1} parent=11 // pred_check
          %p653 = pneg %p423
        $region78: #{inference_vocoder.1} parent=11 // pred_check_branch
          %655 = sbr.rel (%p653) target = $region80
        $region79: #{inference_vocoder.1} parent=11 // pred_region
          _
        $region80: #{inference_vocoder.1} parent=11 // pred_fallthru
          _
        // Predicated region
        $region81: #{inference_vocoder.1} parent=11 // pred_check
          %p656 = pneg %p444
        $region82: #{inference_vocoder.1} parent=11 // pred_check_branch
          %658 = sbr.rel (%p656) target = $region84
        $region83: #{inference_vocoder.1} parent=11 // pred_region
          _
        $region84: #{inference_vocoder.1} parent=11 // pred_fallthru
          _
      $region12: #{inference_vocoder.1} parent=5 // pred_fallthru
        _
      %p659 = scmp.lt.s32.totalorder %s40, 2
      // Predicated region
      $region85: #{inference_vocoder.1} parent=5 // pred_check
        %p660 = pneg %p659
      $region86: #{inference_vocoder.1} parent=5 // pred_check_branch
        %662 = sbr.rel (%p660) target = $region88
      $region87: #{inference_vocoder.1} parent=5 // pred_region
        // Predicated region
        $region89: #{inference_vocoder.1} parent=87 // pred_check
          %p663 = pneg %p60
        $region90: #{inference_vocoder.1} parent=87 // pred_check_branch
          %665 = sbr.rel (%p663) target = $region92
        $region91: #{inference_vocoder.1} parent=87 // pred_region
          %s666 = sand.u32 %s50, 1
          %s667 = scalar_lea.sflag [#allocation4], %s666
          %s668 = sand.u32 %s50, 1
          %s669 = smul.addr %s668, 16
          %s670 = scalar_lea.vmem [#allocation3], %s669
          %s672 = ssub.s32 256, 256
          %673 = vsyncadd %s667, %s672
          %s674 = smul.addr %s40, 2
          %s675 = smul.addr %s674, 128
          %s676 = scalar_lea.hbm %s0, %s675
          %s677 = sshll.u32 %s670, 4
          %s678 = int_to_ptr.vmem [resolvable:$true] %s677
          %683 = dma.hbm_to_vmem [thread:$0]  %s676, 256, %s678, %s667, 128, 128, 8
        $region92: #{inference_vocoder.1} parent=87 // pred_fallthru
          _
      $region88: #{inference_vocoder.1} parent=5 // pred_fallthru
        _
      %p684 = scmp.le.s32.totalorder 1, %s40
      %p685 = scmp.lt.s32.totalorder %s40, 3
      %p686 = pnand %p684, %p685
      %p687 = pneg %p686
      // Predicated region
      $region93: #{inference_vocoder.1} parent=5 // pred_check
        _
      $region94: #{inference_vocoder.1} parent=5 // pred_check_branch
        %689 = sbr.rel (%p686) target = $region96
      $region95: #{inference_vocoder.1} parent=5 // pred_region
        %s690 = ssub.s32 %s40, 1
        %s691 = sand.u32 %s53, 1
        %s692 = scalar_lea.sflag [#allocation4], %s691
        %s693 = sand.u32 %s53, 1
        %s694 = smul.addr %s693, 16
        %s695 = scalar_lea.vmem [#allocation3], %s694
        // Predicated region
        $region97: #{inference_vocoder.1} parent=95 // pred_check
          %p696 = pneg %p66
        $region98: #{inference_vocoder.1} parent=95 // pred_check_branch
          %698 = sbr.rel (%p696) target = $region100
        $region99: #{inference_vocoder.1} parent=95 // pred_region
          %699 = dma.done %s692, 256
        $region100: #{inference_vocoder.1} parent=95 // pred_fallthru
          _
        // Predicated region
        $region101: #{inference_vocoder.1} parent=95 // pred_check
          %p700 = pneg %p87
        $region102: #{inference_vocoder.1} parent=95 // pred_check_branch
          %702 = sbr.rel (%p700) target = $region104
        $region103: #{inference_vocoder.1} parent=95 // pred_region
          %703 = dma.done [#allocation7], 256
        $region104: #{inference_vocoder.1} parent=95 // pred_fallthru
          _
        // Predicated region
        $region105: #{inference_vocoder.1} parent=95 // pred_check
          %p704 = pneg %p108
        $region106: #{inference_vocoder.1} parent=95 // pred_check_branch
          %706 = sbr.rel (%p704) target = $region108
        $region107: #{inference_vocoder.1} parent=95 // pred_region
          %707 = dma.done [#allocation7], 512
        $region108: #{inference_vocoder.1} parent=95 // pred_fallthru
          _
        // Predicated region
        $region109: #{inference_vocoder.1} parent=95 // pred_check
          %p708 = pneg %p129
        $region110: #{inference_vocoder.1} parent=95 // pred_check_branch
          %710 = sbr.rel (%p708) target = $region112
        $region111: #{inference_vocoder.1} parent=95 // pred_region
          %711 = dma.done [#allocation10], 128
        $region112: #{inference_vocoder.1} parent=95 // pred_fallthru
          _
        // Predicated region
        $region113: #{inference_vocoder.1} parent=95 // pred_check
          %p712 = pneg %p150
        $region114: #{inference_vocoder.1} parent=95 // pred_check_branch
          %714 = sbr.rel (%p712) target = $region116
        $region115: #{inference_vocoder.1} parent=95 // pred_region
          %715 = dma.done [#allocation10], 128
        $region116: #{inference_vocoder.1} parent=95 // pred_fallthru
          _
        // Predicated region
        $region117: #{inference_vocoder.1} parent=95 // pred_check
          %p716 = pneg %p171
        $region118: #{inference_vocoder.1} parent=95 // pred_check_branch
          %718 = sbr.rel (%p716) target = $region120
        $region119: #{inference_vocoder.1} parent=95 // pred_region
          %719 = dma.done [#allocation13], 256
        $region120: #{inference_vocoder.1} parent=95 // pred_fallthru
          _
        // Predicated region
        $region121: #{inference_vocoder.1} parent=95 // pred_check
          %p720 = pneg %p192
        $region122: #{inference_vocoder.1} parent=95 // pred_check_branch
          %722 = sbr.rel (%p720) target = $region124
        $region123: #{inference_vocoder.1} parent=95 // pred_region
          %723 = dma.done [#allocation13], 128
        $region124: #{inference_vocoder.1} parent=95 // pred_fallthru
          _
        // Predicated region
        $region125: #{inference_vocoder.1} parent=95 // pred_check
          %p724 = pneg %p213
        $region126: #{inference_vocoder.1} parent=95 // pred_check_branch
          %726 = sbr.rel (%p724) target = $region128
        $region127: #{inference_vocoder.1} parent=95 // pred_region
          %727 = dma.done [#allocation16], 256
        $region128: #{inference_vocoder.1} parent=95 // pred_fallthru
          _
        // Predicated region
        $region129: #{inference_vocoder.1} parent=95 // pred_check
          %p728 = pneg %p234
        $region130: #{inference_vocoder.1} parent=95 // pred_check_branch
          %730 = sbr.rel (%p728) target = $region132
        $region131: #{inference_vocoder.1} parent=95 // pred_region
          %731 = dma.done [#allocation16], 128
        $region132: #{inference_vocoder.1} parent=95 // pred_fallthru
          _
        // Predicated region
        $region133: #{inference_vocoder.1} parent=95 // pred_check
          %p732 = pneg %p276
        $region134: #{inference_vocoder.1} parent=95 // pred_check_branch
          %734 = sbr.rel (%p732) target = $region136
        $region135: #{inference_vocoder.1} parent=95 // pred_region
          %735 = dma.done [#allocation19], 64
        $region136: #{inference_vocoder.1} parent=95 // pred_fallthru
          _
        // Predicated region
        $region137: #{inference_vocoder.1} parent=95 // pred_check
          %p736 = pneg %p297
        $region138: #{inference_vocoder.1} parent=95 // pred_check_branch
          %738 = sbr.rel (%p736) target = $region140
        $region139: #{inference_vocoder.1} parent=95 // pred_region
          %739 = dma.done [#allocation19], 64
        $region140: #{inference_vocoder.1} parent=95 // pred_fallthru
          _
        // Predicated region
        $region141: #{inference_vocoder.1} parent=95 // pred_check
          %p740 = pneg %p318
        $region142: #{inference_vocoder.1} parent=95 // pred_check_branch
          %742 = sbr.rel (%p740) target = $region144
        $region143: #{inference_vocoder.1} parent=95 // pred_region
          %743 = dma.done [#allocation22], 128
        $region144: #{inference_vocoder.1} parent=95 // pred_fallthru
          _
        // Predicated region
        $region145: #{inference_vocoder.1} parent=95 // pred_check
          %p744 = pneg %p339
        $region146: #{inference_vocoder.1} parent=95 // pred_check_branch
          %746 = sbr.rel (%p744) target = $region148
        $region147: #{inference_vocoder.1} parent=95 // pred_region
          %747 = dma.done [#allocation22], 64
        $region148: #{inference_vocoder.1} parent=95 // pred_fallthru
          _
        // Predicated region
        $region149: #{inference_vocoder.1} parent=95 // pred_check
          %p748 = pneg %p360
        $region150: #{inference_vocoder.1} parent=95 // pred_check_branch
          %750 = sbr.rel (%p748) target = $region152
        $region151: #{inference_vocoder.1} parent=95 // pred_region
          %751 = dma.done [#allocation25], 128
        $region152: #{inference_vocoder.1} parent=95 // pred_fallthru
          _
        %s752 = sand.u32 %s53, 1
        %s753 = scalar_lea.sflag [#allocation4], %s752
        %s754 = sand.u32 %s53, 1
        %s755 = smul.addr %s754, 16
        %s756 = scalar_lea.vmem [#allocation3], %s755
        %p757 = pneg %p66
        %p758 = pneg %p63
        %p759 = pneg %p87
        %p760 = pneg %p84
        %p761 = pneg %p108
        %p762 = pneg %p105
        %p763 = pneg %p129
        %p764 = pneg %p126
        %p765 = pneg %p150
        %p766 = pneg %p147
        %p767 = pneg %p171
        %p768 = pneg %p168
        %p769 = pneg %p192
        %p770 = pneg %p189
        %p771 = pneg %p213
        %p772 = pneg %p210
        %p773 = pneg %p234
        %p774 = pneg %p231
        %p775 = pneg %p255
        %p776 = pneg %p252
        %p777 = pneg %p276
        %p778 = pneg %p273
        %p779 = pneg %p297
        %p780 = pneg %p294
        %p781 = pneg %p318
        %p782 = pneg %p315
        %p783 = pneg %p339
        %p784 = pneg %p336
        %p785 = pneg %p360
        %p786 = pneg %p357
        %p787 = pneg %p381
        %p788 = pneg %p378
        %p789 = pneg %p402
        %p790 = pneg %p399
        %p791 = pneg %p423
        %p792 = pneg %p420
        %p793 = pneg %p444
        %p794 = pneg %p441
        %p795 = pneg %p470
        %p796 = pneg %p467
        %s797 = sand.u32 %s457, 1
        %s798 = scalar_lea.sflag [#allocation5], %s797
        %s799 = sand.u32 %s457, 1
        %s800 = scalar_lea.vmem [#allocation26], %s799
        %v802 = vld [vmem:[%s695] sm:$0xff]
        %v803 = vld [vmem:[%s695 + $0x8] sm:$0xff]
        %v804 = vld [vmem:[#allocation6] sm:$0xf]
        %v805 = vld [vmem:[#allocation6 + $0x4] sm:$0xf]
        %v806 = vld [vmem:[#allocation6 + $0x8] sm:$0xf]
        %v807 = vld [vmem:[#allocation6 + $0xc] sm:$0xf]
        %v808 = vld [vmem:[#allocation8] sm:$0xff]
        %v809 = vld [vmem:[#allocation8 + $0x8] sm:$0xff]
        %v810 = vld [vmem:[#allocation8 + $0x10] sm:$0xff]
        %v811 = vld [vmem:[#allocation8 + $0x18] sm:$0xff]
        %814 = vrot.lane.b32.xlu0 %v802, 3
        %v815 = vpop.permute.xlu0 %814
        %816 = vrot.lane.b32.xlu0 %v803, 3
        %v817 = vpop.permute.xlu0 %816
        %vm820 = vcmask 23552
        %v821 = vsel %vm820, 0.0, %v815
        %v822 = vsel %vm820, 0.0, %v817
        %vm823 = vcmask 285696
        %v824 = vsel %vm823, %v821, 0.0
        %v825 = vsel %vm823, %v822, 0.0
        %828 = vrot.lane.b32.xlu0 %v824, 127
        %v829 = vpop.permute.xlu0 %828
        %830 = vrot.lane.b32.xlu0 %v825, 127
        %v831 = vpop.permute.xlu0 %830
        %834 = vrot.lane.b32.xlu0 %v824, 126
        %v835 = vpop.permute.xlu0 %834
        %836 = vrot.lane.b32.xlu0 %v825, 126
        %v837 = vpop.permute.xlu0 %836
        %840 = vrot.lane.b32.xlu0 %v824, 125
        %v841 = vpop.permute.xlu0 %840
        %842 = vrot.lane.b32.xlu0 %v825, 125
        %v843 = vpop.permute.xlu0 %842
        %846 = vrot.lane.b32.xlu0 %v824, 124
        %v847 = vpop.permute.xlu0 %846
        %848 = vrot.lane.b32.xlu0 %v825, 124
        %v849 = vpop.permute.xlu0 %848
        %852 = vrot.lane.b32.xlu0 %v824, 123
        %v853 = vpop.permute.xlu0 %852
        %854 = vrot.lane.b32.xlu0 %v825, 123
        %v855 = vpop.permute.xlu0 %854
        %858 = vrot.lane.b32.xlu0 %v824, 122
        %v859 = vpop.permute.xlu0 %858
        %860 = vrot.lane.b32.xlu0 %v825, 122
        %v861 = vpop.permute.xlu0 %860
        %v864 = vpack.c.bf16 %v825, %v824
        %v865 = vpack.c.bf16 %v831, %v829
        %v866 = vpack.c.bf16 %v837, %v835
        %v867 = vpack.c.bf16 %v843, %v841
        %v868 = vpack.c.bf16 %v849, %v847
        %v869 = vpack.c.bf16 %v855, %v853
        %v870 = vpack.c.bf16 %v861, %v859
        %872 = vset.pattern.permute.xlu0 0
        %873 = vperm.xlu0 %872, %v808
        %v874 = vpop.permute.xlu0 %873
        %877 = vset.pattern.permute.xlu0 0
        %878 = vperm.xlu0 %877, %v809
        %v879 = vpop.permute.xlu0 %878
        %882 = vset.pattern.permute.xlu0 0
        %883 = vperm.xlu0 %882, %v810
        %v884 = vpop.permute.xlu0 %883
        %887 = vset.pattern.permute.xlu0 0
        %888 = vperm.xlu0 %887, %v811
        %v889 = vpop.permute.xlu0 %888
        %v895 = vunpack.c.l.b16 %v804
        %v896 = vunpack.c.l.b16 %v805
        %v897 = vunpack.c.l.b16 %v806
        %v898 = vunpack.c.l.b16 %v807
        %v899 = vpack.c.b16 %v896, %v895
        %v900 = vpack.c.b16 %v898, %v897
        %vm901 = vcmask 916480
        %v903 = vsel %vm901, %v899, 0
        %v906 = vsel %vm901, %v900, 0
        %908 = vmatprep.subr.bf16.mxu0 0
        %909 = vmatpush1.bf16.msra.mxu0 0
        %910 = vmatprep.subr.bf16.mxu0 0
        %911 = vmatpush1.bf16.msra.mxu0 %v870
        %912 = vmatprep.subr.bf16.mxu0 0
        %913 = vmatpush1.bf16.msra.mxu0 %v869
        %914 = vmatprep.subr.bf16.mxu0 0
        %915 = vmatpush1.bf16.msra.mxu0 %v868
        %916 = vmatprep.subr.bf16.mxu0 0
        %917 = vmatpush1.bf16.msra.mxu0 %v867
        %918 = vmatprep.subr.bf16.mxu0 0
        %919 = vmatpush1.bf16.msra.mxu0 %v866
        %920 = vmatprep.subr.bf16.mxu0 0
        %921 = vmatpush1.bf16.msra.mxu0 %v865
        %922 = vmatprep.subr.bf16.mxu0 0
        %923 = vmatpush1.bf16.msra.mxu0 %v864
        %924 = vmatprep.subr.bf16.mxu0 0
        %925 = vmatpush2.bf16.msra.mxu0 0
        %926 = vmatprep.subr.bf16.mxu0 0
        %927 = vmatpush2.bf16.msra.mxu0 0
        %928 = vmatprep.subr.bf16.mxu0 0
        %929 = vmatpush2.bf16.msra.mxu0 0
        %930 = vmatprep.subr.bf16.mxu0 0
        %931 = vmatpush2.bf16.msra.mxu0 0
        %932 = vmatprep.subr.bf16.mxu0 0
        %933 = vmatpush2.bf16.msra.mxu0 0
        %934 = vmatprep.subr.bf16.mxu0 0
        %935 = vmatpush2.bf16.msra.mxu0 0
        %936 = vmatprep.subr.bf16.mxu0 0
        %937 = vmatpush2.bf16.msra.mxu0 0
        %938 = vmatprep.subr.bf16.mxu0 0
        %939 = vmatpush2.bf16.msra.mxu0 0
        %940 = vmatprep.mubr.bf16.mxu0 0
        %941 = vmatmul.mubr.bf16.gmra.mxu0 %v903
        %v942 = vpop.f32.mrf.mxu0
        %v943 = vadd.f32 %v874, %v942
        %v944 = vpop.f32.mrf.mxu0
        %v945 = vpop.f32.mrf.mxu0
        %v946 = vadd.f32 %v879, %v945
        %v947 = vpop.f32.mrf.mxu0
        %948 = vmatprep.mubr.bf16.mxu0 0
        %949 = vmatmul.mubr.bf16.gmra.mxu0 %v906
        %v950 = vpop.f32.mrf.mxu0
        %v951 = vadd.f32 %v884, %v950
        %v952 = vpop.f32.mrf.mxu0
        %v953 = vpop.f32.mrf.mxu0
        %v954 = vadd.f32 %v889, %v953
        %v955 = vpop.f32.mrf.mxu0
        %956 = vdwg.mxu0
        %vm957 = vcmp.gt.f32.partialorder %v943, 0.0
        %vm958 = vcmp.gt.f32.partialorder %v946, 0.0
        %vm959 = vcmp.gt.f32.partialorder %v951, 0.0
        %vm960 = vcmp.gt.f32.partialorder %v954, 0.0
        %v961 = vmul.f32 %v943, 0.1
        %v962 = vmul.f32 %v946, 0.1
        %v963 = vmul.f32 %v951, 0.1
        %v964 = vmul.f32 %v954, 0.1
        %v965 = vsel %vm957, %v943, %v961
        %v966 = vsel %vm958, %v946, %v962
        %v967 = vsel %vm959, %v951, %v963
        %v968 = vsel %vm960, %v954, %v964
        %v969 = vld [vmem:[#allocation9] sm:$0xf]
        %v970 = vld [vmem:[#allocation9 + $0x4] sm:$0xf]
        %v971 = vld [vmem:[#allocation11] sm:$0xf]
        %v972 = vld [vmem:[#allocation11 + $0x4] sm:$0xf]
        %v973 = vld [vmem:[#allocation12] sm:$0xff]
        %v974 = vld [vmem:[#allocation12 + $0x8] sm:$0xff]
        %979 = vrot.lane.b32.xlu0 %v965, 1
        %v980 = vpop.permute.xlu0 %979
        %981 = vrot.lane.b32.xlu0 %v966, 1
        %v982 = vpop.permute.xlu0 %981
        %983 = vrot.lane.b32.xlu0 %v967, 1
        %v984 = vpop.permute.xlu0 %983
        %985 = vrot.lane.b32.xlu0 %v968, 1
        %v986 = vpop.permute.xlu0 %985
        %vm991 = vcmask 7168
        %v992 = vsel %vm991, 0.0, %v980
        %v993 = vsel %vm991, 0.0, %v982
        %v994 = vsel %vm991, 0.0, %v984
        %v995 = vsel %vm991, 0.0, %v986
        %996 = vrot.lane.b32.xlu0 %v965, 127
        %v997 = vpop.permute.xlu0 %996
        %998 = vrot.lane.b32.xlu0 %v966, 127
        %v999 = vpop.permute.xlu0 %998
        %1000 = vrot.lane.b32.xlu0 %v967, 127
        %v1001 = vpop.permute.xlu0 %1000
        %1002 = vrot.lane.b32.xlu0 %v968, 127
        %v1003 = vpop.permute.xlu0 %1002
        %vm1008 = vcmask 252928
        %v1009 = vsel %vm1008, %v997, 0.0
        %v1010 = vsel %vm1008, %v999, 0.0
        %v1011 = vsel %vm1008, %v1001, 0.0
        %v1012 = vsel %vm1008, %v1003, 0.0
        %v1013 = vpack.c.bf16 %v966, %v965
        %v1014 = vpack.c.bf16 %v968, %v967
        %v1015 = vpack.c.bf16 %v993, %v992
        %v1016 = vpack.c.bf16 %v995, %v994
        %v1017 = vpack.c.bf16 %v1010, %v1009
        %v1018 = vpack.c.bf16 %v1012, %v1011
        %v1021 = vunpack.c.l.b16 %v969
        %v1022 = vunpack.c.l.b16 %v970
        %v1023 = vpack.c.b16 %v1022, %v1021
        %vm1024 = vcmask 523264
        %v1026 = vsel %vm1024, %v1023, 0
        %1028 = vmatprep.subr.bf16.mxu0 0
        %1029 = vmatpush1.bf16.msra.mxu0 0
        %1030 = vmatprep.subr.bf16.mxu0 0
        %1031 = vmatpush1.bf16.msra.mxu0 0
        %1032 = vmatprep.subr.bf16.mxu0 0
        %1033 = vmatpush1.bf16.msra.mxu0 0
        %1034 = vmatprep.subr.bf16.mxu0 0
        %1035 = vmatpush1.bf16.msra.mxu0 0
        %1036 = vmatprep.subr.bf16.mxu0 0
        %1037 = vmatpush1.bf16.msra.mxu0 %v1016
        %1038 = vmatprep.subr.bf16.mxu0 0
        %1039 = vmatpush1.bf16.msra.mxu0 %v1015
        %1040 = vmatprep.subr.bf16.mxu0 0
        %1041 = vmatpush1.bf16.msra.mxu0 %v1014
        %1042 = vmatprep.subr.bf16.mxu0 0
        %1043 = vmatpush1.bf16.msra.mxu0 %v1013
        %1044 = vmatprep.subr.bf16.mxu0 0
        %1045 = vmatpush2.bf16.msra.mxu0 0
        %1046 = vmatprep.subr.bf16.mxu0 0
        %1047 = vmatpush2.bf16.msra.mxu0 0
        %1048 = vmatprep.subr.bf16.mxu0 0
        %1049 = vmatpush2.bf16.msra.mxu0 0
        %1050 = vmatprep.subr.bf16.mxu0 0
        %1051 = vmatpush2.bf16.msra.mxu0 0
        %1052 = vmatprep.subr.bf16.mxu0 0
        %1053 = vmatpush2.bf16.msra.mxu0 0
        %1054 = vmatprep.subr.bf16.mxu0 0
        %1055 = vmatpush2.bf16.msra.mxu0 0
        %1056 = vmatprep.subr.bf16.mxu0 0
        %1057 = vmatpush2.bf16.msra.mxu0 0
        %1058 = vmatprep.subr.bf16.mxu0 0
        %1059 = vmatpush2.bf16.msra.mxu0 0
        %1060 = vmatprep.mubr.bf16.mxu0 0
        %1061 = vmatmul.mubr.bf16.gmra.mxu0 %v1026
        %v1062 = vpop.f32.mrf.mxu0
        %v1063 = vadd.f32 0.0, %v1062
        %v1064 = vpop.f32.mrf.mxu0
        %v1065 = vpop.f32.mrf.mxu0
        %v1066 = vadd.f32 0.0, %v1065
        %v1067 = vpop.f32.mrf.mxu0
        %1068 = vdwg.mxu0
        %v1071 = vunpack.c.l.b16 %v971
        %v1072 = vunpack.c.l.b16 %v972
        %v1073 = vpack.c.b16 %v1072, %v1071
        %v1075 = vsel %vm1024, %v1073, 0
        %1077 = vmatprep.subr.bf16.mxu0 0
        %1078 = vmatpush1.bf16.msra.mxu0 0
        %1079 = vmatprep.subr.bf16.mxu0 0
        %1080 = vmatpush1.bf16.msra.mxu0 0
        %1081 = vmatprep.subr.bf16.mxu0 0
        %1082 = vmatpush1.bf16.msra.mxu0 0
        %1083 = vmatprep.subr.bf16.mxu0 0
        %1084 = vmatpush1.bf16.msra.mxu0 0
        %1085 = vmatprep.subr.bf16.mxu0 0
        %1086 = vmatpush1.bf16.msra.mxu0 %v1014
        %1087 = vmatprep.subr.bf16.mxu0 0
        %1088 = vmatpush1.bf16.msra.mxu0 %v1013
        %1089 = vmatprep.subr.bf16.mxu0 0
        %1090 = vmatpush1.bf16.msra.mxu0 %v1018
        %1091 = vmatprep.subr.bf16.mxu0 0
        %1092 = vmatpush1.bf16.msra.mxu0 %v1017
        %1093 = vmatprep.subr.bf16.mxu0 0
        %1094 = vmatpush2.bf16.msra.mxu0 0
        %1095 = vmatprep.subr.bf16.mxu0 0
        %1096 = vmatpush2.bf16.msra.mxu0 0
        %1097 = vmatprep.subr.bf16.mxu0 0
        %1098 = vmatpush2.bf16.msra.mxu0 0
        %1099 = vmatprep.subr.bf16.mxu0 0
        %1100 = vmatpush2.bf16.msra.mxu0 0
        %1101 = vmatprep.subr.bf16.mxu0 0
        %1102 = vmatpush2.bf16.msra.mxu0 0
        %1103 = vmatprep.subr.bf16.mxu0 0
        %1104 = vmatpush2.bf16.msra.mxu0 0
        %1105 = vmatprep.subr.bf16.mxu0 0
        %1106 = vmatpush2.bf16.msra.mxu0 0
        %1107 = vmatprep.subr.bf16.mxu0 0
        %1108 = vmatpush2.bf16.msra.mxu0 0
        %1109 = vmatprep.mubr.bf16.mxu0 0
        %1110 = vmatmul.mubr.bf16.gmra.mxu0 %v1075
        %v1111 = vpop.f32.mrf.mxu0
        %v1112 = vadd.f32 0.0, %v1111
        %v1113 = vpop.f32.mrf.mxu0
        %v1114 = vpop.f32.mrf.mxu0
        %v1115 = vadd.f32 0.0, %v1114
        %v1116 = vpop.f32.mrf.mxu0
        %1117 = vdwg.mxu0
        %v1118 = vlaneseq
        %v1119 = vshrl.u32 %v1118, 7
        %v1120 = vadd.s32 %v1119, 8
        %v1121 = vadd.s32 %v1119, 16
        %v1122 = vadd.s32 %v1119, 24
        %v1123 = vlaneseq
        %v1124 = vand.u32 %v1123, 127
        %v1125 = vmul.u32 %v1119, 2
        %v1126 = vmul.u32 %v1120, 2
        %v1127 = vmul.u32 %v1121, 2
        %v1128 = vmul.u32 %v1122, 2
        %vm1129 = vcmp.eq.s32.totalorder %v1124, %v1125
        %vm1130 = vcmp.eq.s32.totalorder %v1124, %v1126
        %vm1131 = vcmp.eq.s32.totalorder %v1124, %v1127
        %vm1132 = vcmp.eq.s32.totalorder %v1124, %v1128
        %v1133 = vsel %vm1129, 1, 0
        %v1134 = vsel %vm1130, 1, 0
        %v1135 = vsel %vm1131, 1, 0
        %v1136 = vsel %vm1132, 1, 0
        %v1137 = vcvt.s32.f32 %v1133
        %v1138 = vcvt.s32.f32 %v1134
        %v1139 = vcvt.s32.f32 %v1135
        %v1140 = vcvt.s32.f32 %v1136
        %v1141 = vadd.s32 %v1125, 1
        %v1142 = vadd.s32 %v1126, 1
        %v1143 = vadd.s32 %v1127, 1
        %v1144 = vadd.s32 %v1128, 1
        %vm1145 = vcmp.eq.s32.totalorder %v1124, %v1141
        %vm1146 = vcmp.eq.s32.totalorder %v1124, %v1142
        %vm1147 = vcmp.eq.s32.totalorder %v1124, %v1143
        %vm1148 = vcmp.eq.s32.totalorder %v1124, %v1144
        %v1149 = vsel %vm1145, 1, 0
        %v1150 = vsel %vm1146, 1, 0
        %v1151 = vsel %vm1147, 1, 0
        %v1152 = vsel %vm1148, 1, 0
        %v1153 = vcvt.s32.f32 %v1149
        %v1154 = vcvt.s32.f32 %v1150
        %v1155 = vcvt.s32.f32 %v1151
        %v1156 = vcvt.s32.f32 %v1152
        %vm1157 = vcmask 261120
        %v1159 = vsel %vm1157, %v1112, 0
        %v1162 = vsel %vm1157, %v1115, 0
        %1164 = vmatprep.subr.mxu0 0.0
        %1165 = vmatpush1.msra.mxu0 0.0
        %1166 = vmatprep.subr.mxu0 0.0
        %1167 = vmatpush1.msra.mxu0 0.0
        %1168 = vmatprep.subr.mxu0 0.0
        %1169 = vmatpush1.msra.mxu0 0.0
        %1170 = vmatprep.subr.mxu0 0.0
        %1171 = vmatpush1.msra.mxu0 0.0
        %1172 = vmatprep.subr.mxu0 0.0
        %1173 = vmatpush1.msra.mxu0 0.0
        %1174 = vmatprep.subr.mxu0 0.0
        %1175 = vmatpush1.msra.mxu0 0.0
        %1176 = vmatprep.subr.mxu0 0.0
        %1177 = vmatpush1.msra.mxu0 0.0
        %1178 = vmatprep.subr.mxu0 0.0
        %1179 = vmatpush1.msra.mxu0 0.0
        %1180 = vmatprep.subr.mxu0 0.0
        %1181 = vmatpush1.msra.mxu0 0.0
        %1182 = vmatprep.subr.mxu0 0.0
        %1183 = vmatpush1.msra.mxu0 0.0
        %1184 = vmatprep.subr.mxu0 0.0
        %1185 = vmatpush1.msra.mxu0 0.0
        %1186 = vmatprep.subr.mxu0 0.0
        %1187 = vmatpush1.msra.mxu0 0.0
        %1188 = vmatprep.subr.mxu0 0.0
        %1189 = vmatpush1.msra.mxu0 %v1156
        %1190 = vmatprep.subr.mxu0 0.0
        %1191 = vmatpush1.msra.mxu0 %v1155
        %1192 = vmatprep.subr.mxu0 0.0
        %1193 = vmatpush1.msra.mxu0 %v1154
        %1194 = vmatprep.subr.mxu0 0.0
        %1195 = vmatpush1.msra.mxu0 %v1153
        %1196 = vmatprep.subr.mxu0 0.0
        %1197 = vmatpush2.msra.mxu0 0.0
        %1198 = vmatprep.subr.mxu0 0.0
        %1199 = vmatpush2.msra.mxu0 0.0
        %1200 = vmatprep.subr.mxu0 0.0
        %1201 = vmatpush2.msra.mxu0 0.0
        %1202 = vmatprep.subr.mxu0 0.0
        %1203 = vmatpush2.msra.mxu0 0.0
        %1204 = vmatprep.subr.mxu0 0.0
        %1205 = vmatpush2.msra.mxu0 0.0
        %1206 = vmatprep.subr.mxu0 0.0
        %1207 = vmatpush2.msra.mxu0 0.0
        %1208 = vmatprep.subr.mxu0 0.0
        %1209 = vmatpush2.msra.mxu0 0.0
        %1210 = vmatprep.subr.mxu0 0.0
        %1211 = vmatpush2.msra.mxu0 0.0
        %1212 = vmatprep.subr.mxu0 0.0
        %1213 = vmatpush2.msra.mxu0 0.0
        %1214 = vmatprep.subr.mxu0 0.0
        %1215 = vmatpush2.msra.mxu0 0.0
        %1216 = vmatprep.subr.mxu0 0.0
        %1217 = vmatpush2.msra.mxu0 0.0
        %1218 = vmatprep.subr.mxu0 0.0
        %1219 = vmatpush2.msra.mxu0 0.0
        %1220 = vmatprep.subr.mxu0 0.0
        %1221 = vmatpush2.msra.mxu0 0.0
        %1222 = vmatprep.subr.mxu0 0.0
        %1223 = vmatpush2.msra.mxu0 0.0
        %1224 = vmatprep.subr.mxu0 0.0
        %1225 = vmatpush2.msra.mxu0 0.0
        %1226 = vmatprep.subr.mxu0 0.0
        %1227 = vmatpush2.msra.mxu0 0.0
        %1228 = vmatprep.mubr.f32.mxu0 0.0
        %1229 = vmatmul.mubr.f32.gmra.mxu0 %v1159
        %v1230 = vpop.f32.mrf.mxu0
        %v1231 = vadd.f32 0.0, %v1230
        %v1232 = vpop.f32.mrf.mxu0
        %1233 = vmatprep.mubr.f32.mxu0 0.0
        %1234 = vmatmul.mubr.f32.gmra.mxu0 %v1162
        %v1235 = vpop.f32.mrf.mxu0
        %v1236 = vadd.f32 0.0, %v1235
        %v1237 = vpop.f32.mrf.mxu0
        %1238 = vdwg.mxu0
        %v1240 = vsel %vm1157, %v1063, 0
        %v1243 = vsel %vm1157, %v1066, 0
        %1245 = vmatprep.subr.mxu0 0.0
        %1246 = vmatpush1.msra.mxu0 0.0
        %1247 = vmatprep.subr.mxu0 0.0
        %1248 = vmatpush1.msra.mxu0 0.0
        %1249 = vmatprep.subr.mxu0 0.0
        %1250 = vmatpush1.msra.mxu0 0.0
        %1251 = vmatprep.subr.mxu0 0.0
        %1252 = vmatpush1.msra.mxu0 0.0
        %1253 = vmatprep.subr.mxu0 0.0
        %1254 = vmatpush1.msra.mxu0 0.0
        %1255 = vmatprep.subr.mxu0 0.0
        %1256 = vmatpush1.msra.mxu0 0.0
        %1257 = vmatprep.subr.mxu0 0.0
        %1258 = vmatpush1.msra.mxu0 0.0
        %1259 = vmatprep.subr.mxu0 0.0
        %1260 = vmatpush1.msra.mxu0 0.0
        %1261 = vmatprep.subr.mxu0 0.0
        %1262 = vmatpush1.msra.mxu0 0.0
        %1263 = vmatprep.subr.mxu0 0.0
        %1264 = vmatpush1.msra.mxu0 0.0
        %1265 = vmatprep.subr.mxu0 0.0
        %1266 = vmatpush1.msra.mxu0 0.0
        %1267 = vmatprep.subr.mxu0 0.0
        %1268 = vmatpush1.msra.mxu0 0.0
        %1269 = vmatprep.subr.mxu0 0.0
        %1270 = vmatpush1.msra.mxu0 %v1140
        %1271 = vmatprep.subr.mxu0 0.0
        %1272 = vmatpush1.msra.mxu0 %v1139
        %1273 = vmatprep.subr.mxu0 0.0
        %1274 = vmatpush1.msra.mxu0 %v1138
        %1275 = vmatprep.subr.mxu0 0.0
        %1276 = vmatpush1.msra.mxu0 %v1137
        %1277 = vmatprep.subr.mxu0 0.0
        %1278 = vmatpush2.msra.mxu0 0.0
        %1279 = vmatprep.subr.mxu0 0.0
        %1280 = vmatpush2.msra.mxu0 0.0
        %1281 = vmatprep.subr.mxu0 0.0
        %1282 = vmatpush2.msra.mxu0 0.0
        %1283 = vmatprep.subr.mxu0 0.0
        %1284 = vmatpush2.msra.mxu0 0.0
        %1285 = vmatprep.subr.mxu0 0.0
        %1286 = vmatpush2.msra.mxu0 0.0
        %1287 = vmatprep.subr.mxu0 0.0
        %1288 = vmatpush2.msra.mxu0 0.0
        %1289 = vmatprep.subr.mxu0 0.0
        %1290 = vmatpush2.msra.mxu0 0.0
        %1291 = vmatprep.subr.mxu0 0.0
        %1292 = vmatpush2.msra.mxu0 0.0
        %1293 = vmatprep.subr.mxu0 0.0
        %1294 = vmatpush2.msra.mxu0 0.0
        %1295 = vmatprep.subr.mxu0 0.0
        %1296 = vmatpush2.msra.mxu0 0.0
        %1297 = vmatprep.subr.mxu0 0.0
        %1298 = vmatpush2.msra.mxu0 0.0
        %1299 = vmatprep.subr.mxu0 0.0
        %1300 = vmatpush2.msra.mxu0 0.0
        %1301 = vmatprep.subr.mxu0 0.0
        %1302 = vmatpush2.msra.mxu0 0.0
        %1303 = vmatprep.subr.mxu0 0.0
        %1304 = vmatpush2.msra.mxu0 0.0
        %1305 = vmatprep.subr.mxu0 0.0
        %1306 = vmatpush2.msra.mxu0 0.0
        %1307 = vmatprep.subr.mxu0 0.0
        %1308 = vmatpush2.msra.mxu0 0.0
        %1309 = vmatprep.mubr.f32.mxu0 0.0
        %1310 = vmatmul.mubr.f32.gmra.mxu0 %v1240
        %v1311 = vpop.f32.mrf.mxu0
        %v1312 = vadd.f32 %v1231, %v1311
        %v1313 = vpop.f32.mrf.mxu0
        %1314 = vmatprep.mubr.f32.mxu0 0.0
        %1315 = vmatmul.mubr.f32.gmra.mxu0 %v1243
        %v1316 = vpop.f32.mrf.mxu0
        %v1317 = vadd.f32 %v1236, %v1316
        %v1318 = vpop.f32.mrf.mxu0
        %1319 = vdwg.mxu0
        %1321 = vset.pattern.permute.xlu0 0
        %1322 = vperm.xlu0 %1321, %v973
        %v1323 = vpop.permute.xlu0 %1322
        %1326 = vset.pattern.permute.xlu0 0
        %1327 = vperm.xlu0 %1326, %v974
        %v1328 = vpop.permute.xlu0 %1327
        %v1330 = vadd.f32 %v1312, %v1323
        %v1331 = vadd.f32 %v1317, %v1328
        %vm1332 = vcmp.gt.f32.partialorder %v1330, 0.0
        %vm1333 = vcmp.gt.f32.partialorder %v1331, 0.0
        %v1334 = vmul.f32 %v1330, 0.1
        %v1335 = vmul.f32 %v1331, 0.1
        %v1336 = vsel %vm1332, %v1330, %v1334
        %v1337 = vsel %vm1333, %v1331, %v1335
        %v1338 = vld [vmem:[#allocation14] sm:$0xf]
        %v1339 = vld [vmem:[#allocation14 + $0x4] sm:$0xf]
        %v1340 = vld [vmem:[#allocation15] sm:$0xff]
        %v1341 = vld [vmem:[#allocation15 + $0x8] sm:$0xff]
        %1344 = vrot.lane.b32.xlu0 %v1336, 1
        %v1345 = vpop.permute.xlu0 %1344
        %1346 = vrot.lane.b32.xlu0 %v1337, 1
        %v1347 = vpop.permute.xlu0 %1346
        %v1350 = vsel %vm991, 0.0, %v1345
        %v1351 = vsel %vm991, 0.0, %v1347
        %vm1352 = vcmask 531456
        %v1353 = vsel %vm1352, %v1350, 0.0
        %v1354 = vsel %vm1352, %v1351, 0.0
        %1357 = vrot.lane.b32.xlu0 %v1353, 127
        %v1358 = vpop.permute.xlu0 %1357
        %1359 = vrot.lane.b32.xlu0 %v1354, 127
        %v1360 = vpop.permute.xlu0 %1359
        %1363 = vrot.lane.b32.xlu0 %v1353, 126
        %v1364 = vpop.permute.xlu0 %1363
        %1365 = vrot.lane.b32.xlu0 %v1354, 126
        %v1366 = vpop.permute.xlu0 %1365
        %v1369 = vpack.c.bf16 %v1354, %v1353
        %v1370 = vpack.c.bf16 %v1360, %v1358
        %v1371 = vpack.c.bf16 %v1366, %v1364
        %1373 = vset.pattern.permute.xlu0 0
        %1374 = vperm.xlu0 %1373, %v1340
        %v1375 = vpop.permute.xlu0 %1374
        %1378 = vset.pattern.permute.xlu0 0
        %1379 = vperm.xlu0 %1378, %v1341
        %v1380 = vpop.permute.xlu0 %1379
        %v1384 = vunpack.c.l.b16 %v1338
        %v1385 = vunpack.c.l.b16 %v1339
        %v1386 = vpack.c.b16 %v1385, %v1384
        %vm1387 = vcmask 392192
        %v1389 = vsel %vm1387, %v1386, 0
        %1391 = vmatprep.subr.bf16.mxu0 0
        %1392 = vmatpush1.bf16.msra.mxu0 0
        %1393 = vmatprep.subr.bf16.mxu0 0
        %1394 = vmatpush1.bf16.msra.mxu0 0
        %1395 = vmatprep.subr.bf16.mxu0 0
        %1396 = vmatpush1.bf16.msra.mxu0 0
        %1397 = vmatprep.subr.bf16.mxu0 0
        %1398 = vmatpush1.bf16.msra.mxu0 0
        %1399 = vmatprep.subr.bf16.mxu0 0
        %1400 = vmatpush1.bf16.msra.mxu0 0
        %1401 = vmatprep.subr.bf16.mxu0 0
        %1402 = vmatpush1.bf16.msra.mxu0 %v1371
        %1403 = vmatprep.subr.bf16.mxu0 0
        %1404 = vmatpush1.bf16.msra.mxu0 %v1370
        %1405 = vmatprep.subr.bf16.mxu0 0
        %1406 = vmatpush1.bf16.msra.mxu0 %v1369
        %1407 = vmatprep.subr.bf16.mxu0 0
        %1408 = vmatpush2.bf16.msra.mxu0 0
        %1409 = vmatprep.subr.bf16.mxu0 0
        %1410 = vmatpush2.bf16.msra.mxu0 0
        %1411 = vmatprep.subr.bf16.mxu0 0
        %1412 = vmatpush2.bf16.msra.mxu0 0
        %1413 = vmatprep.subr.bf16.mxu0 0
        %1414 = vmatpush2.bf16.msra.mxu0 0
        %1415 = vmatprep.subr.bf16.mxu0 0
        %1416 = vmatpush2.bf16.msra.mxu0 0
        %1417 = vmatprep.subr.bf16.mxu0 0
        %1418 = vmatpush2.bf16.msra.mxu0 0
        %1419 = vmatprep.subr.bf16.mxu0 0
        %1420 = vmatpush2.bf16.msra.mxu0 0
        %1421 = vmatprep.subr.bf16.mxu0 0
        %1422 = vmatpush2.bf16.msra.mxu0 0
        %1423 = vmatprep.mubr.bf16.mxu0 0
        %1424 = vmatmul.mubr.bf16.gmra.mxu0 %v1389
        %v1425 = vpop.f32.mrf.mxu0
        %v1426 = vadd.f32 %v1375, %v1425
        %v1427 = vpop.f32.mrf.mxu0
        %v1428 = vpop.f32.mrf.mxu0
        %v1429 = vadd.f32 %v1380, %v1428
        %v1430 = vpop.f32.mrf.mxu0
        %1431 = vdwg.mxu0
        %v1432 = vadd.f32 %v1330, %v1426
        %v1433 = vadd.f32 %v1331, %v1429
        %vm1434 = vcmp.gt.f32.partialorder %v1432, 0.0
        %vm1435 = vcmp.gt.f32.partialorder %v1433, 0.0
        %v1436 = vmul.f32 %v1432, 0.1
        %v1437 = vmul.f32 %v1433, 0.1
        %v1438 = vsel %vm1434, %v1432, %v1436
        %v1439 = vsel %vm1435, %v1433, %v1437
        %v1440 = vld [vmem:[#allocation17] sm:$0xf]
        %v1441 = vld [vmem:[#allocation17 + $0x4] sm:$0xf]
        %v1442 = vld [vmem:[%s9] sm:$0xff]
        %v1443 = vld [vmem:[%s9 + $0x8] sm:$0xff]
        %1446 = vrot.lane.b32.xlu0 %v1438, 3
        %v1447 = vpop.permute.xlu0 %1446
        %1448 = vrot.lane.b32.xlu0 %v1439, 3
        %v1449 = vpop.permute.xlu0 %1448
        %v1452 = vsel %vm820, 0.0, %v1447
        %v1453 = vsel %vm820, 0.0, %v1449
        %vm1454 = vcmask 547840
        %v1455 = vsel %vm1454, %v1452, 0.0
        %v1456 = vsel %vm1454, %v1453, 0.0
        %1459 = vrot.lane.b32.xlu0 %v1455, 125
        %v1460 = vpop.permute.xlu0 %1459
        %1461 = vrot.lane.b32.xlu0 %v1456, 125
        %v1462 = vpop.permute.xlu0 %1461
        %1465 = vrot.lane.b32.xlu0 %v1455, 122
        %v1466 = vpop.permute.xlu0 %1465
        %1467 = vrot.lane.b32.xlu0 %v1456, 122
        %v1468 = vpop.permute.xlu0 %1467
        %v1471 = vpack.c.bf16 %v1456, %v1455
        %v1472 = vpack.c.bf16 %v1462, %v1460
        %v1473 = vpack.c.bf16 %v1468, %v1466
        %1475 = vset.pattern.permute.xlu0 0
        %1476 = vperm.xlu0 %1475, %v1442
        %v1477 = vpop.permute.xlu0 %1476
        %1480 = vset.pattern.permute.xlu0 0
        %1481 = vperm.xlu0 %1480, %v1443
        %v1482 = vpop.permute.xlu0 %1481
        %v1486 = vunpack.c.l.b16 %v1440
        %v1487 = vunpack.c.l.b16 %v1441
        %v1488 = vpack.c.b16 %v1487, %v1486
        %v1490 = vsel %vm1387, %v1488, 0
        %1492 = vmatprep.subr.bf16.mxu0 0
        %1493 = vmatpush1.bf16.msra.mxu0 0
        %1494 = vmatprep.subr.bf16.mxu0 0
        %1495 = vmatpush1.bf16.msra.mxu0 0
        %1496 = vmatprep.subr.bf16.mxu0 0
        %1497 = vmatpush1.bf16.msra.mxu0 0
        %1498 = vmatprep.subr.bf16.mxu0 0
        %1499 = vmatpush1.bf16.msra.mxu0 0
        %1500 = vmatprep.subr.bf16.mxu0 0
        %1501 = vmatpush1.bf16.msra.mxu0 0
        %1502 = vmatprep.subr.bf16.mxu0 0
        %1503 = vmatpush1.bf16.msra.mxu0 %v1473
        %1504 = vmatprep.subr.bf16.mxu0 0
        %1505 = vmatpush1.bf16.msra.mxu0 %v1472
        %1506 = vmatprep.subr.bf16.mxu0 0
        %1507 = vmatpush1.bf16.msra.mxu0 %v1471
        %1508 = vmatprep.subr.bf16.mxu0 0
        %1509 = vmatpush2.bf16.msra.mxu0 0
        %1510 = vmatprep.subr.bf16.mxu0 0
        %1511 = vmatpush2.bf16.msra.mxu0 0
        %1512 = vmatprep.subr.bf16.mxu0 0
        %1513 = vmatpush2.bf16.msra.mxu0 0
        %1514 = vmatprep.subr.bf16.mxu0 0
        %1515 = vmatpush2.bf16.msra.mxu0 0
        %1516 = vmatprep.subr.bf16.mxu0 0
        %1517 = vmatpush2.bf16.msra.mxu0 0
        %1518 = vmatprep.subr.bf16.mxu0 0
        %1519 = vmatpush2.bf16.msra.mxu0 0
        %1520 = vmatprep.subr.bf16.mxu0 0
        %1521 = vmatpush2.bf16.msra.mxu0 0
        %1522 = vmatprep.subr.bf16.mxu0 0
        %1523 = vmatpush2.bf16.msra.mxu0 0
        %1524 = vmatprep.mubr.bf16.mxu0 0
        %1525 = vmatmul.mubr.bf16.gmra.mxu0 %v1490
        %v1526 = vpop.f32.mrf.mxu0
        %v1527 = vadd.f32 %v1477, %v1526
        %v1528 = vpop.f32.mrf.mxu0
        %v1529 = vpop.f32.mrf.mxu0
        %v1530 = vadd.f32 %v1482, %v1529
        %v1531 = vpop.f32.mrf.mxu0
        %1532 = vdwg.mxu0
        %v1533 = vadd.f32 %v1432, %v1527
        %v1534 = vadd.f32 %v1433, %v1530
        %vm1535 = vcmp.gt.f32.partialorder %v1533, 0.0
        %vm1536 = vcmp.gt.f32.partialorder %v1534, 0.0
        %v1537 = vmul.f32 %v1533, 0.1
        %v1538 = vmul.f32 %v1534, 0.1
        %v1539 = vsel %vm1535, %v1533, %v1537
        %v1540 = vsel %vm1536, %v1534, %v1538
        %v1541 = vld [vmem:[#allocation18] sm:$0xf]
        %v1542 = vld [vmem:[#allocation20] sm:$0xf]
        %v1543 = vld [vmem:[#allocation21] sm:$0xff]
        %1546 = vrot.lane.b32.xlu0 %v1539, 1
        %v1547 = vpop.permute.xlu0 %1546
        %1548 = vrot.lane.b32.xlu0 %v1540, 1
        %v1549 = vpop.permute.xlu0 %1548
        %v1552 = vsel %vm991, 0.0, %v1547
        %v1553 = vsel %vm991, 0.0, %v1549
        %1554 = vrot.lane.b32.xlu0 %v1539, 127
        %v1555 = vpop.permute.xlu0 %1554
        %1556 = vrot.lane.b32.xlu0 %v1540, 127
        %v1557 = vpop.permute.xlu0 %1556
        %vm1560 = vcmask 515072
        %v1561 = vsel %vm1560, %v1555, 0.0
        %v1562 = vsel %vm1560, %v1557, 0.0
        %v1563 = vpack.c.bf16 %v1540, %v1539
        %v1564 = vpack.c.bf16 %v1553, %v1552
        %v1565 = vpack.c.bf16 %v1562, %v1561
        %v1567 = vsel %vm1157, %v1541, 0
        %1569 = vmatprep.subr.bf16.mxu0 0
        %1570 = vmatpush1.bf16.msra.mxu0 0
        %1571 = vmatprep.subr.bf16.mxu0 0
        %1572 = vmatpush1.bf16.msra.mxu0 0
        %1573 = vmatprep.subr.bf16.mxu0 0
        %1574 = vmatpush1.bf16.msra.mxu0 0
        %1575 = vmatprep.subr.bf16.mxu0 0
        %1576 = vmatpush1.bf16.msra.mxu0 0
        %1577 = vmatprep.subr.bf16.mxu0 0
        %1578 = vmatpush1.bf16.msra.mxu0 0
        %1579 = vmatprep.subr.bf16.mxu0 0
        %1580 = vmatpush1.bf16.msra.mxu0 0
        %1581 = vmatprep.subr.bf16.mxu0 0
        %1582 = vmatpush1.bf16.msra.mxu0 %v1564
        %1583 = vmatprep.subr.bf16.mxu0 0
        %1584 = vmatpush1.bf16.msra.mxu0 %v1563
        %1585 = vmatprep.subr.bf16.mxu0 0
        %1586 = vmatpush2.bf16.msra.mxu0 0
        %1587 = vmatprep.subr.bf16.mxu0 0
        %1588 = vmatpush2.bf16.msra.mxu0 0
        %1589 = vmatprep.subr.bf16.mxu0 0
        %1590 = vmatpush2.bf16.msra.mxu0 0
        %1591 = vmatprep.subr.bf16.mxu0 0
        %1592 = vmatpush2.bf16.msra.mxu0 0
        %1593 = vmatprep.subr.bf16.mxu0 0
        %1594 = vmatpush2.bf16.msra.mxu0 0
        %1595 = vmatprep.subr.bf16.mxu0 0
        %1596 = vmatpush2.bf16.msra.mxu0 0
        %1597 = vmatprep.subr.bf16.mxu0 0
        %1598 = vmatpush2.bf16.msra.mxu0 0
        %1599 = vmatprep.subr.bf16.mxu0 0
        %1600 = vmatpush2.bf16.msra.mxu0 0
        %1601 = vmatprep.mubr.bf16.mxu0 0
        %1602 = vmatmul.mubr.bf16.gmra.mxu0 %v1567
        %v1603 = vpop.f32.mrf.mxu0
        %v1604 = vadd.f32 0.0, %v1603
        %v1605 = vpop.f32.mrf.mxu0
        %v1606 = vpop.f32.mrf.mxu0
        %v1607 = vpop.f32.mrf.mxu0
        %1608 = vdwg.mxu0
        %v1610 = vsel %vm1157, %v1542, 0
        %1612 = vmatprep.subr.bf16.mxu0 0
        %1613 = vmatpush1.bf16.msra.mxu0 0
        %1614 = vmatprep.subr.bf16.mxu0 0
        %1615 = vmatpush1.bf16.msra.mxu0 0
        %1616 = vmatprep.subr.bf16.mxu0 0
        %1617 = vmatpush1.bf16.msra.mxu0 0
        %1618 = vmatprep.subr.bf16.mxu0 0
        %1619 = vmatpush1.bf16.msra.mxu0 0
        %1620 = vmatprep.subr.bf16.mxu0 0
        %1621 = vmatpush1.bf16.msra.mxu0 0
        %1622 = vmatprep.subr.bf16.mxu0 0
        %1623 = vmatpush1.bf16.msra.mxu0 0
        %1624 = vmatprep.subr.bf16.mxu0 0
        %1625 = vmatpush1.bf16.msra.mxu0 %v1563
        %1626 = vmatprep.subr.bf16.mxu0 0
        %1627 = vmatpush1.bf16.msra.mxu0 %v1565
        %1628 = vmatprep.subr.bf16.mxu0 0
        %1629 = vmatpush2.bf16.msra.mxu0 0
        %1630 = vmatprep.subr.bf16.mxu0 0
        %1631 = vmatpush2.bf16.msra.mxu0 0
        %1632 = vmatprep.subr.bf16.mxu0 0
        %1633 = vmatpush2.bf16.msra.mxu0 0
        %1634 = vmatprep.subr.bf16.mxu0 0
        %1635 = vmatpush2.bf16.msra.mxu0 0
        %1636 = vmatprep.subr.bf16.mxu0 0
        %1637 = vmatpush2.bf16.msra.mxu0 0
        %1638 = vmatprep.subr.bf16.mxu0 0
        %1639 = vmatpush2.bf16.msra.mxu0 0
        %1640 = vmatprep.subr.bf16.mxu0 0
        %1641 = vmatpush2.bf16.msra.mxu0 0
        %1642 = vmatprep.subr.bf16.mxu0 0
        %1643 = vmatpush2.bf16.msra.mxu0 0
        %1644 = vmatprep.mubr.bf16.mxu0 0
        %1645 = vmatmul.mubr.bf16.gmra.mxu0 %v1610
        %v1646 = vpop.f32.mrf.mxu0
        %v1647 = vadd.f32 0.0, %v1646
        %v1648 = vpop.f32.mrf.mxu0
        %v1649 = vpop.f32.mrf.mxu0
        %v1650 = vpop.f32.mrf.mxu0
        %1651 = vdwg.mxu0
        %v1652 = vadd.s32 %v1119, 32
        %v1653 = vadd.s32 %v1119, 40
        %v1654 = vadd.s32 %v1119, 48
        %v1655 = vadd.s32 %v1119, 56
        %v1656 = vmul.u32 %v1652, 2
        %v1657 = vmul.u32 %v1653, 2
        %v1658 = vmul.u32 %v1654, 2
        %v1659 = vmul.u32 %v1655, 2
        %vm1660 = vcmp.eq.s32.totalorder %v1124, %v1656
        %vm1661 = vcmp.eq.s32.totalorder %v1124, %v1657
        %vm1662 = vcmp.eq.s32.totalorder %v1124, %v1658
        %vm1663 = vcmp.eq.s32.totalorder %v1124, %v1659
        %v1664 = vsel %vm1660, 1, 0
        %v1665 = vsel %vm1661, 1, 0
        %v1666 = vsel %vm1662, 1, 0
        %v1667 = vsel %vm1663, 1, 0
        %v1668 = vcvt.s32.f32 %v1664
        %v1669 = vcvt.s32.f32 %v1665
        %v1670 = vcvt.s32.f32 %v1666
        %v1671 = vcvt.s32.f32 %v1667
        %v1672 = vadd.s32 %v1656, 1
        %v1673 = vadd.s32 %v1657, 1
        %v1674 = vadd.s32 %v1658, 1
        %v1675 = vadd.s32 %v1659, 1
        %vm1676 = vcmp.eq.s32.totalorder %v1124, %v1672
        %vm1677 = vcmp.eq.s32.totalorder %v1124, %v1673
        %vm1678 = vcmp.eq.s32.totalorder %v1124, %v1674
        %vm1679 = vcmp.eq.s32.totalorder %v1124, %v1675
        %v1680 = vsel %vm1676, 1, 0
        %v1681 = vsel %vm1677, 1, 0
        %v1682 = vsel %vm1678, 1, 0
        %v1683 = vsel %vm1679, 1, 0
        %v1684 = vcvt.s32.f32 %v1680
        %v1685 = vcvt.s32.f32 %v1681
        %v1686 = vcvt.s32.f32 %v1682
        %v1687 = vcvt.s32.f32 %v1683
        %v1689 = vsel %vm1024, %v1647, 0
        %1691 = vmatprep.subr.mxu0 0.0
        %1692 = vmatpush1.msra.mxu0 0.0
        %1693 = vmatprep.subr.mxu0 0.0
        %1694 = vmatpush1.msra.mxu0 0.0
        %1695 = vmatprep.subr.mxu0 0.0
        %1696 = vmatpush1.msra.mxu0 0.0
        %1697 = vmatprep.subr.mxu0 0.0
        %1698 = vmatpush1.msra.mxu0 0.0
        %1699 = vmatprep.subr.mxu0 0.0
        %1700 = vmatpush1.msra.mxu0 0.0
        %1701 = vmatprep.subr.mxu0 0.0
        %1702 = vmatpush1.msra.mxu0 0.0
        %1703 = vmatprep.subr.mxu0 0.0
        %1704 = vmatpush1.msra.mxu0 0.0
        %1705 = vmatprep.subr.mxu0 0.0
        %1706 = vmatpush1.msra.mxu0 0.0
        %1707 = vmatprep.subr.mxu0 0.0
        %1708 = vmatpush1.msra.mxu0 %v1687
        %1709 = vmatprep.subr.mxu0 0.0
        %1710 = vmatpush1.msra.mxu0 %v1686
        %1711 = vmatprep.subr.mxu0 0.0
        %1712 = vmatpush1.msra.mxu0 %v1685
        %1713 = vmatprep.subr.mxu0 0.0
        %1714 = vmatpush1.msra.mxu0 %v1684
        %1715 = vmatprep.subr.mxu0 0.0
        %1716 = vmatpush1.msra.mxu0 %v1156
        %1717 = vmatprep.subr.mxu0 0.0
        %1718 = vmatpush1.msra.mxu0 %v1155
        %1719 = vmatprep.subr.mxu0 0.0
        %1720 = vmatpush1.msra.mxu0 %v1154
        %1721 = vmatprep.subr.mxu0 0.0
        %1722 = vmatpush1.msra.mxu0 %v1153
        %1723 = vmatprep.subr.mxu0 0.0
        %1724 = vmatpush2.msra.mxu0 0.0
        %1725 = vmatprep.subr.mxu0 0.0
        %1726 = vmatpush2.msra.mxu0 0.0
        %1727 = vmatprep.subr.mxu0 0.0
        %1728 = vmatpush2.msra.mxu0 0.0
        %1729 = vmatprep.subr.mxu0 0.0
        %1730 = vmatpush2.msra.mxu0 0.0
        %1731 = vmatprep.subr.mxu0 0.0
        %1732 = vmatpush2.msra.mxu0 0.0
        %1733 = vmatprep.subr.mxu0 0.0
        %1734 = vmatpush2.msra.mxu0 0.0
        %1735 = vmatprep.subr.mxu0 0.0
        %1736 = vmatpush2.msra.mxu0 0.0
        %1737 = vmatprep.subr.mxu0 0.0
        %1738 = vmatpush2.msra.mxu0 0.0
        %1739 = vmatprep.subr.mxu0 0.0
        %1740 = vmatpush2.msra.mxu0 0.0
        %1741 = vmatprep.subr.mxu0 0.0
        %1742 = vmatpush2.msra.mxu0 0.0
        %1743 = vmatprep.subr.mxu0 0.0
        %1744 = vmatpush2.msra.mxu0 0.0
        %1745 = vmatprep.subr.mxu0 0.0
        %1746 = vmatpush2.msra.mxu0 0.0
        %1747 = vmatprep.subr.mxu0 0.0
        %1748 = vmatpush2.msra.mxu0 0.0
        %1749 = vmatprep.subr.mxu0 0.0
        %1750 = vmatpush2.msra.mxu0 0.0
        %1751 = vmatprep.subr.mxu0 0.0
        %1752 = vmatpush2.msra.mxu0 0.0
        %1753 = vmatprep.subr.mxu0 0.0
        %1754 = vmatpush2.msra.mxu0 0.0
        %1755 = vmatprep.mubr.f32.mxu0 0.0
        %1756 = vmatmul.mubr.f32.gmra.mxu0 %v1689
        %v1757 = vpop.f32.mrf.mxu0
        %v1758 = vadd.f32 0.0, %v1757
        %v1759 = vpop.f32.mrf.mxu0
        %1760 = vdwg.mxu0
        %v1762 = vsel %vm1024, %v1604, 0
        %1764 = vmatprep.subr.mxu0 0.0
        %1765 = vmatpush1.msra.mxu0 0.0
        %1766 = vmatprep.subr.mxu0 0.0
        %1767 = vmatpush1.msra.mxu0 0.0
        %1768 = vmatprep.subr.mxu0 0.0
        %1769 = vmatpush1.msra.mxu0 0.0
        %1770 = vmatprep.subr.mxu0 0.0
        %1771 = vmatpush1.msra.mxu0 0.0
        %1772 = vmatprep.subr.mxu0 0.0
        %1773 = vmatpush1.msra.mxu0 0.0
        %1774 = vmatprep.subr.mxu0 0.0
        %1775 = vmatpush1.msra.mxu0 0.0
        %1776 = vmatprep.subr.mxu0 0.0
        %1777 = vmatpush1.msra.mxu0 0.0
        %1778 = vmatprep.subr.mxu0 0.0
        %1779 = vmatpush1.msra.mxu0 0.0
        %1780 = vmatprep.subr.mxu0 0.0
        %1781 = vmatpush1.msra.mxu0 %v1671
        %1782 = vmatprep.subr.mxu0 0.0
        %1783 = vmatpush1.msra.mxu0 %v1670
        %1784 = vmatprep.subr.mxu0 0.0
        %1785 = vmatpush1.msra.mxu0 %v1669
        %1786 = vmatprep.subr.mxu0 0.0
        %1787 = vmatpush1.msra.mxu0 %v1668
        %1788 = vmatprep.subr.mxu0 0.0
        %1789 = vmatpush1.msra.mxu0 %v1140
        %1790 = vmatprep.subr.mxu0 0.0
        %1791 = vmatpush1.msra.mxu0 %v1139
        %1792 = vmatprep.subr.mxu0 0.0
        %1793 = vmatpush1.msra.mxu0 %v1138
        %1794 = vmatprep.subr.mxu0 0.0
        %1795 = vmatpush1.msra.mxu0 %v1137
        %1796 = vmatprep.subr.mxu0 0.0
        %1797 = vmatpush2.msra.mxu0 0.0
        %1798 = vmatprep.subr.mxu0 0.0
        %1799 = vmatpush2.msra.mxu0 0.0
        %1800 = vmatprep.subr.mxu0 0.0
        %1801 = vmatpush2.msra.mxu0 0.0
        %1802 = vmatprep.subr.mxu0 0.0
        %1803 = vmatpush2.msra.mxu0 0.0
        %1804 = vmatprep.subr.mxu0 0.0
        %1805 = vmatpush2.msra.mxu0 0.0
        %1806 = vmatprep.subr.mxu0 0.0
        %1807 = vmatpush2.msra.mxu0 0.0
        %1808 = vmatprep.subr.mxu0 0.0
        %1809 = vmatpush2.msra.mxu0 0.0
        %1810 = vmatprep.subr.mxu0 0.0
        %1811 = vmatpush2.msra.mxu0 0.0
        %1812 = vmatprep.subr.mxu0 0.0
        %1813 = vmatpush2.msra.mxu0 0.0
        %1814 = vmatprep.subr.mxu0 0.0
        %1815 = vmatpush2.msra.mxu0 0.0
        %1816 = vmatprep.subr.mxu0 0.0
        %1817 = vmatpush2.msra.mxu0 0.0
        %1818 = vmatprep.subr.mxu0 0.0
        %1819 = vmatpush2.msra.mxu0 0.0
        %1820 = vmatprep.subr.mxu0 0.0
        %1821 = vmatpush2.msra.mxu0 0.0
        %1822 = vmatprep.subr.mxu0 0.0
        %1823 = vmatpush2.msra.mxu0 0.0
        %1824 = vmatprep.subr.mxu0 0.0
        %1825 = vmatpush2.msra.mxu0 0.0
        %1826 = vmatprep.subr.mxu0 0.0
        %1827 = vmatpush2.msra.mxu0 0.0
        %1828 = vmatprep.mubr.f32.mxu0 0.0
        %1829 = vmatmul.mubr.f32.gmra.mxu0 %v1762
        %v1830 = vpop.f32.mrf.mxu0
        %v1831 = vadd.f32 %v1758, %v1830
        %v1832 = vpop.f32.mrf.mxu0
        %1833 = vdwg.mxu0
        %1835 = vset.pattern.permute.xlu0 0
        %1836 = vperm.xlu0 %1835, %v1543
        %v1837 = vpop.permute.xlu0 %1836
        %v1839 = vadd.f32 %v1831, %v1837
        %vm1840 = vcmp.gt.f32.partialorder %v1839, 0.0
        %v1841 = vmul.f32 %v1839, 0.1
        %v1842 = vsel %vm1840, %v1839, %v1841
        %v1843 = vld [vmem:[#allocation23] sm:$0xf]
        %v1844 = vld [vmem:[#allocation24] sm:$0xff]
        %1846 = vrot.lane.b32.xlu0 %v1842, 1
        %v1847 = vpop.permute.xlu0 %1846
        %v1849 = vsel %vm991, 0.0, %v1847
        %v1850 = vsel %vm991, %v1847, 0.0
        %1853 = vrot.lane.b32.xlu0 %v1849, 127
        %v1854 = vpop.permute.xlu0 %1853
        %1855 = vrot.lane.b32.xlu0 %v1850, 127
        %v1856 = vpop.permute.xlu0 %1855
        %vm1857 = vcmask 1039360
        %v1858 = vsel %vm1857, %v1854, %v1856
        %1860 = vrot.lane.b32.xlu0 %v1849, 126
        %v1861 = vpop.permute.xlu0 %1860
        %1862 = vrot.lane.b32.xlu0 %v1850, 126
        %v1863 = vpop.permute.xlu0 %1862
        %vm1864 = vcmask 1031168
        %v1865 = vsel %vm1864, %v1861, %v1863
        %v1867 = vpack.c.bf16 %v1858, %v1849
        %v1868 = vpack.c.bf16 %v1865, %v1865
        %1870 = vset.pattern.permute.xlu0 0
        %1871 = vperm.xlu0 %1870, %v1844
        %v1872 = vpop.permute.xlu0 %1871
        %vm1874 = vcmask 195584
        %v1876 = vsel %vm1874, %v1843, 0
        %vm1878 = vcmask 1043456
        %v1880 = vsel %vm1878, %v1868, 0
        %1882 = vmatprep.subr.bf16.mxu0 0
        %1883 = vmatpush1.bf16.msra.mxu0 0
        %1884 = vmatprep.subr.bf16.mxu0 0
        %1885 = vmatpush1.bf16.msra.mxu0 0
        %1886 = vmatprep.subr.bf16.mxu0 0
        %1887 = vmatpush1.bf16.msra.mxu0 0
        %1888 = vmatprep.subr.bf16.mxu0 0
        %1889 = vmatpush1.bf16.msra.mxu0 0
        %1890 = vmatprep.subr.bf16.mxu0 0
        %1891 = vmatpush1.bf16.msra.mxu0 0
        %1892 = vmatprep.subr.bf16.mxu0 0
        %1893 = vmatpush1.bf16.msra.mxu0 0
        %1894 = vmatprep.subr.bf16.mxu0 0
        %1895 = vmatpush1.bf16.msra.mxu0 %v1880
        %1896 = vmatprep.subr.bf16.mxu0 0
        %1897 = vmatpush1.bf16.msra.mxu0 %v1867
        %1898 = vmatprep.subr.bf16.mxu0 0
        %1899 = vmatpush2.bf16.msra.mxu0 0
        %1900 = vmatprep.subr.bf16.mxu0 0
        %1901 = vmatpush2.bf16.msra.mxu0 0
        %1902 = vmatprep.subr.bf16.mxu0 0
        %1903 = vmatpush2.bf16.msra.mxu0 0
        %1904 = vmatprep.subr.bf16.mxu0 0
        %1905 = vmatpush2.bf16.msra.mxu0 0
        %1906 = vmatprep.subr.bf16.mxu0 0
        %1907 = vmatpush2.bf16.msra.mxu0 0
        %1908 = vmatprep.subr.bf16.mxu0 0
        %1909 = vmatpush2.bf16.msra.mxu0 0
        %1910 = vmatprep.subr.bf16.mxu0 0
        %1911 = vmatpush2.bf16.msra.mxu0 0
        %1912 = vmatprep.subr.bf16.mxu0 0
        %1913 = vmatpush2.bf16.msra.mxu0 0
        %1914 = vmatprep.mubr.bf16.mxu0 0
        %1915 = vmatmul.mubr.bf16.gmra.mxu0 %v1876
        %v1916 = vpop.f32.mrf.mxu0
        %v1917 = vadd.f32 %v1872, %v1916
        %v1918 = vpop.f32.mrf.mxu0
        %v1919 = vpop.f32.mrf.mxu0
        %v1920 = vpop.f32.mrf.mxu0
        %1921 = vdwg.mxu0
        %v1922 = vadd.f32 %v1839, %v1917
        %vm1923 = vcmp.gt.f32.partialorder %v1922, 0.0
        %v1924 = vmul.f32 %v1922, 0.1
        %v1925 = vsel %vm1923, %v1922, %v1924
        %v1926 = vld [vmem:[%s15] sm:$0xf]
        %v1927 = vld [vmem:[%s16] sm:$0xff]
        %1929 = vrot.lane.b32.xlu0 %v1925, 3
        %v1930 = vpop.permute.xlu0 %1929
        %v1932 = vsel %vm820, 0.0, %v1930
        %v1933 = vsel %vm820, %v1930, 0.0
        %1936 = vrot.lane.b32.xlu0 %v1932, 125
        %v1937 = vpop.permute.xlu0 %1936
        %1938 = vrot.lane.b32.xlu0 %v1933, 125
        %v1939 = vpop.permute.xlu0 %1938
        %vm1940 = vcmask 1022976
        %v1941 = vsel %vm1940, %v1937, %v1939
        %1943 = vrot.lane.b32.xlu0 %v1932, 122
        %v1944 = vpop.permute.xlu0 %1943
        %1945 = vrot.lane.b32.xlu0 %v1933, 122
        %v1946 = vpop.permute.xlu0 %1945
        %vm1947 = vcmask 998400
        %v1948 = vsel %vm1947, %v1944, %v1946
        %v1950 = vpack.c.bf16 %v1941, %v1932
        %v1951 = vpack.c.bf16 %v1948, %v1948
        %1953 = vset.pattern.permute.xlu0 0
        %1954 = vperm.xlu0 %1953, %v1927
        %v1955 = vpop.permute.xlu0 %1954
        %v1958 = vsel %vm1874, %v1926, 0
        %v1961 = vsel %vm1878, %v1951, 0
        %1963 = vmatprep.subr.bf16.mxu0 0
        %1964 = vmatpush1.bf16.msra.mxu0 0
        %1965 = vmatprep.subr.bf16.mxu0 0
        %1966 = vmatpush1.bf16.msra.mxu0 0
        %1967 = vmatprep.subr.bf16.mxu0 0
        %1968 = vmatpush1.bf16.msra.mxu0 0
        %1969 = vmatprep.subr.bf16.mxu0 0
        %1970 = vmatpush1.bf16.msra.mxu0 0
        %1971 = vmatprep.subr.bf16.mxu0 0
        %1972 = vmatpush1.bf16.msra.mxu0 0
        %1973 = vmatprep.subr.bf16.mxu0 0
        %1974 = vmatpush1.bf16.msra.mxu0 0
        %1975 = vmatprep.subr.bf16.mxu0 0
        %1976 = vmatpush1.bf16.msra.mxu0 %v1961
        %1977 = vmatprep.subr.bf16.mxu0 0
        %1978 = vmatpush1.bf16.msra.mxu0 %v1950
        %1979 = vmatprep.subr.bf16.mxu0 0
        %1980 = vmatpush2.bf16.msra.mxu0 0
        %1981 = vmatprep.subr.bf16.mxu0 0
        %1982 = vmatpush2.bf16.msra.mxu0 0
        %1983 = vmatprep.subr.bf16.mxu0 0
        %1984 = vmatpush2.bf16.msra.mxu0 0
        %1985 = vmatprep.subr.bf16.mxu0 0
        %1986 = vmatpush2.bf16.msra.mxu0 0
        %1987 = vmatprep.subr.bf16.mxu0 0
        %1988 = vmatpush2.bf16.msra.mxu0 0
        %1989 = vmatprep.subr.bf16.mxu0 0
        %1990 = vmatpush2.bf16.msra.mxu0 0
        %1991 = vmatprep.subr.bf16.mxu0 0
        %1992 = vmatpush2.bf16.msra.mxu0 0
        %1993 = vmatprep.subr.bf16.mxu0 0
        %1994 = vmatpush2.bf16.msra.mxu0 0
        %1995 = vmatprep.mubr.bf16.mxu0 0
        %1996 = vmatmul.mubr.bf16.gmra.mxu0 %v1958
        %v1997 = vpop.f32.mrf.mxu0
        %v1998 = vadd.f32 %v1955, %v1997
        %v1999 = vpop.f32.mrf.mxu0
        %v2000 = vpop.f32.mrf.mxu0
        %v2001 = vpop.f32.mrf.mxu0
        %2002 = vdwg.mxu0
        %v2003 = vadd.f32 %v1922, %v1998
        %vm2004 = vcmp.gt.f32.partialorder %v2003, 0.0
        %v2005 = vmul.f32 %v2003, 0.1
        %v2006 = vsel %vm2004, %v2003, %v2005
        %v2007 = vld [vmem:[%s17] sm:$0x1]
        %v2008 = vld [vmem:[#allocation2] sm:$0x1]
        %2010 = vrot.lane.b32.xlu0 %v2006, 3
        %v2011 = vpop.permute.xlu0 %2010
        %v2013 = vsel %vm820, 0.0, %v2011
        %v2014 = vsel %vm820, %v2011, 0.0
        %2017 = vrot.lane.b32.xlu0 %v2013, 127
        %v2018 = vpop.permute.xlu0 %2017
        %2019 = vrot.lane.b32.xlu0 %v2014, 127
        %v2020 = vpop.permute.xlu0 %2019
        %v2021 = vsel %vm1857, %v2018, %v2020
        %2023 = vrot.lane.b32.xlu0 %v2013, 126
        %v2024 = vpop.permute.xlu0 %2023
        %2025 = vrot.lane.b32.xlu0 %v2014, 126
        %v2026 = vpop.permute.xlu0 %2025
        %v2027 = vsel %vm1864, %v2024, %v2026
        %2029 = vrot.lane.b32.xlu0 %v2013, 125
        %v2030 = vpop.permute.xlu0 %2029
        %2031 = vrot.lane.b32.xlu0 %v2014, 125
        %v2032 = vpop.permute.xlu0 %2031
        %v2033 = vsel %vm1940, %v2030, %v2032
        %2035 = vrot.lane.b32.xlu0 %v2013, 124
        %v2036 = vpop.permute.xlu0 %2035
        %2037 = vrot.lane.b32.xlu0 %v2014, 124
        %v2038 = vpop.permute.xlu0 %2037
        %vm2039 = vcmask 1014784
        %v2040 = vsel %vm2039, %v2036, %v2038
        %2042 = vrot.lane.b32.xlu0 %v2013, 123
        %v2043 = vpop.permute.xlu0 %2042
        %2044 = vrot.lane.b32.xlu0 %v2014, 123
        %v2045 = vpop.permute.xlu0 %2044
        %vm2046 = vcmask 1006592
        %v2047 = vsel %vm2046, %v2043, %v2045
        %2049 = vrot.lane.b32.xlu0 %v2013, 122
        %v2050 = vpop.permute.xlu0 %2049
        %2051 = vrot.lane.b32.xlu0 %v2014, 122
        %v2052 = vpop.permute.xlu0 %2051
        %v2053 = vsel %vm1947, %v2050, %v2052
        %v2055 = vpack.c.bf16 %v2021, %v2013
        %v2056 = vpack.c.bf16 %v2033, %v2027
        %v2057 = vpack.c.bf16 %v2047, %v2040
        %v2058 = vpack.c.bf16 %v2053, %v2053
        %2060 = vset.pattern.permute.xlu0 0
        %2061 = vperm.xlu0 %2060, %v2008
        %v2062 = vpop.permute.xlu0 %2061
        %v2064 = vlaneseq
        %v2065 = vshrl.u32 %v2064, 7
        %v2066 = vsub.s32 0, %v2065
        %v2067 = vrot.slane %v2062, %v2066
        %vm2068 = vcmask 457728
        %v2070 = vsel %vm2068, %v2007, 0
        %v2073 = vsel %vm1878, %v2058, 0
        %2075 = vmatprep.subr.bf16.mxu0 0
        %2076 = vmatpush1.bf16.msra.mxu0 0
        %2077 = vmatprep.subr.bf16.mxu0 0
        %2078 = vmatpush1.bf16.msra.mxu0 0
        %2079 = vmatprep.subr.bf16.mxu0 0
        %2080 = vmatpush1.bf16.msra.mxu0 0
        %2081 = vmatprep.subr.bf16.mxu0 0
        %2082 = vmatpush1.bf16.msra.mxu0 0
        %2083 = vmatprep.subr.bf16.mxu0 0
        %2084 = vmatpush1.bf16.msra.mxu0 %v2073
        %2085 = vmatprep.subr.bf16.mxu0 0
        %2086 = vmatpush1.bf16.msra.mxu0 %v2057
        %2087 = vmatprep.subr.bf16.mxu0 0
        %2088 = vmatpush1.bf16.msra.mxu0 %v2056
        %2089 = vmatprep.subr.bf16.mxu0 0
        %2090 = vmatpush1.bf16.msra.mxu0 %v2055
        %2091 = vmatprep.subr.bf16.mxu0 0
        %2092 = vmatpush2.bf16.msra.mxu0 0
        %2093 = vmatprep.subr.bf16.mxu0 0
        %2094 = vmatpush2.bf16.msra.mxu0 0
        %2095 = vmatprep.subr.bf16.mxu0 0
        %2096 = vmatpush2.bf16.msra.mxu0 0
        %2097 = vmatprep.subr.bf16.mxu0 0
        %2098 = vmatpush2.bf16.msra.mxu0 0
        %2099 = vmatprep.subr.bf16.mxu0 0
        %2100 = vmatpush2.bf16.msra.mxu0 0
        %2101 = vmatprep.subr.bf16.mxu0 0
        %2102 = vmatpush2.bf16.msra.mxu0 0
        %2103 = vmatprep.subr.bf16.mxu0 0
        %2104 = vmatpush2.bf16.msra.mxu0 0
        %2105 = vmatprep.subr.bf16.mxu0 0
        %2106 = vmatpush2.bf16.msra.mxu0 0
        %2107 = vmatprep.mubr.bf16.mxu0 0
        %2108 = vmatmul.mubr.bf16.gmra.mxu0 %v2070
        %v2109 = vpop.f32.mrf.mxu0
        %v2110 = vadd.f32 %v2067, %v2109
        %v2111 = vpop.f32.mrf.mxu0
        %v2112 = vpop.f32.mrf.mxu0
        %v2113 = vpop.f32.mrf.mxu0
        %2114 = vdwg.mxu0
        %v2115 = vtanh.pop %v2110
        %2116 = vst [vmem:[%s800] sm:$0x1] %v2115
        %s2117 = sand.u32 %s457, 1
        %s2118 = scalar_lea.sflag [#allocation5], %s2117
        %s2119 = sand.u32 %s457, 1
        %s2120 = scalar_lea.vmem [#allocation26], %s2119
        // Predicated region
        $region153: #{inference_vocoder.1} parent=95 // pred_check
          %p2121 = pneg %p467
        $region154: #{inference_vocoder.1} parent=95 // pred_check_branch
          %2123 = sbr.rel (%p2121) target = $region156
        $region155: #{inference_vocoder.1} parent=95 // pred_region
          %s2125 = ssub.s32 16, 16
          %2126 = vsyncadd %s2118, %s2125
          %s2127 = smul.addr %s45, 16
          %s2128 = scalar_lea.hbm %s19, %s2127
          %s2130 = sshll.u32 %s2120, 4
          %s2131 = int_to_ptr.vmem [resolvable:$true] %s2130
          %2133 = dma.vmem_to_hbm [thread:$0]  %s2131, 16, %s2128, %s2118
        $region156: #{inference_vocoder.1} parent=95 // pred_fallthru
          _
      $region96: #{inference_vocoder.1} parent=5 // pred_fallthru
        _
      %p2134 = scmp.le.s32.totalorder 2, %s40
      // Predicated region
      $region157: #{inference_vocoder.1} parent=5 // pred_check
        %p2135 = pneg %p2134
      $region158: #{inference_vocoder.1} parent=5 // pred_check_branch
        %2137 = sbr.rel (%p2135) target = $region160
      $region159: #{inference_vocoder.1} parent=5 // pred_region
        %s2138 = ssub.s32 %s40, 2
        // Predicated region
        $region161: #{inference_vocoder.1} parent=159 // pred_check
          %p2139 = pneg %p473
        $region162: #{inference_vocoder.1} parent=159 // pred_check_branch
          %2141 = sbr.rel (%p2139) target = $region164
        $region163: #{inference_vocoder.1} parent=159 // pred_region
          %s2142 = sand.u32 %s458, 1
          %s2143 = scalar_lea.sflag [#allocation5], %s2142
          %s2144 = sand.u32 %s458, 1
          %s2145 = scalar_lea.vmem [#allocation26], %s2144
          %2146 = dma.done %s2143, 16
        $region164: #{inference_vocoder.1} parent=159 // pred_fallthru
          _
      $region160: #{inference_vocoder.1} parent=5 // pred_fallthru
        _
    $region6: #{inference_vocoder.1} parent=1 // loop_footer
      %s44 = sadd.s32 1, %s40
    $region7: #{inference_vocoder.1} parent=1 // loop_footer_branch
      %39 = sbr.rel target = $region3
    $region8: #{inference_vocoder.1} parent=1 // loop_exit
      _
    %2147 = vsyncpa [#allocation4], 1
    %s2148 = scalar_lea.sflag [#allocation4], 1
    %2149 = vsyncpa %s2148, 1
    %2150 = vsyncpa [#allocation7], 1
    %2151 = vsyncpa [#allocation10], 1
    %2152 = vsyncpa [#allocation13], 1
    %2153 = vsyncpa [#allocation16], 1
    %2154 = vsyncpa [#allocation19], 1
    %2155 = vsyncpa [#allocation22], 1
    %2156 = vsyncpa [#allocation25], 1
    %2157 = vsyncpa [#allocation5], 1
    %s2158 = scalar_lea.sflag [#allocation5], 1
    %2159 = vsyncpa %s2158, 1

</llo_original>
